<compile_context>
chip_gen: v6e
topology: v6e:2x2x1
jax: 0.10.0
libtpu: 0.0.40
codegen_flags: <defaults>
</compile_context>

<pallas_src>
import functools
import math

import numpy as np
import jax
import jax.numpy as jnp
from jax.experimental import pallas as pl
from jax.experimental.pallas import tpu as pltpu


def _round_up(v, m):
    return -(-v // m) * m


# ----------------------------------------------------------------------------
# Host-side weight construction (plain numpy, fp64, cast at the end)
# ----------------------------------------------------------------------------
def _np_sinc(x):
    return np.where(x != 0, np.sin(np.pi * x) / (np.pi * x), 1.0)


def _np_lanczos(x, a):
    cond = np.logical_and(-a < x, x < a)
    out = np.where(cond, _np_sinc(x) * _np_sinc(x / a), 0.0)
    return out / out.sum()


def _np_ramp(ratio, width):
    n = math.ceil(width / ratio + 1)
    out = np.empty([n], dtype=np.float64)
    cur = 0.0
    for i in range(n):
        out[i] = cur
        cur += ratio
    return np.concatenate([-out[1:][::-1], out])[1:-1]


def _lanczos_conv_matrix(size, dsize):
    """(size, size) matrix == reflect-pad + 1-D Lanczos anti-alias conv along one axis."""
    kernel = _np_lanczos(_np_ramp(dsize / size, 2), 2)
    K = kernel.shape[0]
    pad = (K - 1) // 2
    L = np.zeros((size, size), dtype=np.float64)
    for j in range(size):
        for t in range(K):
            p = j + t - pad
            if p < 0:
                p = -p                           # 'reflect' (no edge repeat)
            elif p >= size:
                p = 2 * (size - 1) - p
            L[j, p] += kernel[t]
    return L


def _bicubic_matrix(size_in, size_out):
    """(size_out, size_in) bicubic interpolation matrix, align_corners=True, a=-0.75."""
    A = -0.75

    def cc1(x):      # |x| <= 1
        return ((A + 2.0) * x - (A + 3.0)) * x * x + 1.0

    def cc2(x):      # 1 < |x| < 2
        return ((A * x - 5.0 * A) * x + 8.0 * A) * x - 4.0 * A

    M = np.zeros((size_out, size_in), dtype=np.float64)
    scale = 0.0 if size_out <= 1 else (size_in - 1) / (size_out - 1)
    for i in range(size_out):
        src = scale * i
        idx = int(np.floor(src))
        t = src - idx
        w = (cc2(t + 1.0), cc1(t), cc1(1.0 - t), cc2(2.0 - t))
        for k in range(4):
            p = min(max(idx - 1 + k, 0), size_in - 1)
            M[i, p] += w[k]
    return M


def _cut_matrix(axis_len, pad, offset, size, cut_size):
    """(cut_size, axis_len) matrix that, applied to the ORIGINAL (unpadded) axis, performs:
    zero-pad by `pad` -> crop [offset, offset+size) in padded coords -> Lanczos anti-alias
    (if downsampling) -> bicubic(align_corners=True) resize to cut_size."""
    M = _bicubic_matrix(size, cut_size)                        # (cut, size)
    if cut_size < size:
        M = M @ _lanczos_conv_matrix(size, cut_size)           # fold anti-alias conv
    full = np.zeros((cut_size, axis_len + 2 * pad), dtype=np.float64)
    full[:, offset:offset + size] = M                          # place in padded coords
    return full[:, pad:pad + axis_len]                         # pad columns hit zeros -> drop


# ----------------------------------------------------------------------------
# Chip detection / VMEM budgeting / B-block selection
# ----------------------------------------------------------------------------
def _tpu_vmem_and_is_v7():
    cap = None
    try:
        info = pltpu.get_tpu_info()
        v = getattr(info, "vmem_capacity_bytes", None)
        if v:
            cap = int(v)
    except Exception:
        pass
    kind = ""
    try:
        kind = jax.devices()[0].device_kind.lower()
    except Exception:
        pass
    is_v7 = ("v7" in kind) or (cap is not None and cap <= 64 * 1024 * 1024)
    if cap is None:
        cap = 64 * 1024 * 1024 if is_v7 else 128 * 1024 * 1024
    return cap, is_v7


def _vmem_budget(cap, is_v7):
    if is_v7 or cap <= 64 * 1024 * 1024:
        return 48 * 1024 * 1024          # leave headroom out of 64 MiB physical (v7x)
    return 96 * 1024 * 1024              # v5e / v6e: 128 MiB physical


def _pick_b_block(B, H_p, W_p, cut_p, budget_bytes, want_two_blocks=False,
                  max_b_block=64):
    """Largest divisor of B (capped) whose full per-step VMEM footprint fits the budget.
    Counts: 2x x block, 2x mh, 2x mwT (bf16), 2x out block + assembled tile (f32) and the
    per-image intermediate.  On v7x prefer >= 2 B-blocks so both TensorCores get disjoint
    image slabs."""
    in_b, acc_b = 2, 4   # bf16 inputs, fp32 accumulation / output

    def step_vmem(bb):
        return (2 * bb * H_p * W_p * in_b            # x block (double-buffered)
                + 2 * cut_p * H_p * in_b             # mh block
                + 2 * W_p * cut_p * in_b             # mwT block
                + 2 * cut_p * bb * cut_p * acc_b     # out block (double-buffered)
                + cut_p * bb * cut_p * acc_b         # assembled tile before the store
                + H_p * cut_p * acc_b)               # per-image intermediate u

    cap = min(B, max_b_block)
    candidates = [bb for bb in range(1, cap + 1)
                  if B % bb == 0 and step_vmem(bb) <= budget_bytes]
    if not candidates:
        return 1
    best = max(candidates)
    if want_two_blocks and B // best < 2:
        two = [bb for bb in candidates if B // bb >= 2]
        if two:
            best = max(two)
    return best


# ----------------------------------------------------------------------------
# Pallas kernel: one B-block x one cutout per grid step (bf16 MXU, fp32 accum)
# ----------------------------------------------------------------------------
def _make_cutouts_kernel(b_block, H_p, cut_p):
    def kernel(x_ref, mh_ref, mwT_ref, o_ref):
        # x_ref  : (b_block*H_p, W_p) bf16 -- b_block image-channels stacked on sublanes
        # mh_ref : (cut_p, H_p)       bf16 -- this cutout's row matrix (pad+crop folded in)
        # mwT_ref: (W_p, cut_p)       bf16 -- this cutout's column matrix, transposed
        # o_ref  : (cut_p, b_block*cut_p) f32
        mh = mh_ref[...]
        mwT = mwT_ref[...]
        pieces = []
        for b in range(b_block):                               # static unroll
            xb = x_ref[b * H_p:(b + 1) * H_p, :]               # 16-aligned slice (no copy)
            u = jnp.dot(xb, mwT,
                        preferred_element_type=jnp.float32)    # (H_p, cut_p)
            piece = jnp.dot(mh, u.astype(jnp.bfloat16),
                            preferred_element_type=jnp.float32)  # (cut_p, cut_p)
            pieces.append(piece)
        # One lane-dense, unmasked full-block store.
        o_ref[...] = jnp.concatenate(pieces, axis=1).astype(o_ref.dtype)
    return kernel


@functools.partial(jax.jit,
                   static_argnames=("cutn", "cut_size", "b_block", "vmem_limit_bytes"))
def _fused_cutouts(x, mh_all, mwT_all, *, cutn, cut_size, b_block, vmem_limit_bytes):
    """x: (N, C, H, W); mh_all: (cutn*cut_p, H_p) bf16; mwT_all: (cutn*W_p, cut_p) bf16.
    Returns (cutn*N, C, cut, cut) with the cutout index outermost (== torch.cat(dim=0))."""
    N, C, H, W = x.shape
    B = N * C
    cs = cut_size
    cut_p = _round_up(cs, 128)
    H_p = mh_all.shape[1]
    W_p = mwT_all.shape[0] // cutn

    # bf16 image slab; H/W padding rows & cols are multiplied by zero matrix entries.
    xb = jnp.pad(x.astype(jnp.bfloat16).reshape(B, H, W),
                 ((0, 0), (0, H_p - H), (0, W_p - W)))
    x2 = xb.reshape(B * H_p, W_p)

    cost = pl.CostEstimate(
        flops=2 * cutn * B * (H_p * W_p * cut_p + H_p * cut_p * cut_p),
        transcendentals=0,
        bytes_accessed=2 * (B * H_p * W_p + cutn * cut_p * H_p + cutn * W_p * cut_p)
                       + 4 * cutn * B * cut_p * cut_p,
    )
    out = pl.pallas_call(
        _make_cutouts_kernel(b_block, H_p, cut_p),
        out_shape=jax.ShapeDtypeStruct((cutn * cut_p, B * cut_p), jnp.float32),
        grid=(B // b_block, cutn),          # cutout axis innermost -> x block reused
        in_specs=[
            pl.BlockSpec((b_block * H_p, W_p), lambda b, n: (b, 0)),   # const along n
            pl.BlockSpec((cut_p, H_p), lambda b, n: (n, 0)),
            pl.BlockSpec((W_p, cut_p), lambda b, n: (n, 0)),
        ],
        out_specs=pl.BlockSpec((cut_p, b_block * cut_p), lambda b, n: (n, b)),
        compiler_params=pltpu.CompilerParams(
            # B axis "parallel", cutn axis "arbitrary": on v7x the megacore split lands on
            # B, giving each TensorCore a disjoint image slab (no duplicate x DMA/VMEM).
            dimension_semantics=("parallel", "arbitrary"),
            vmem_limit_bytes=vmem_limit_bytes),
        cost_estimate=cost,
    )(x2, mh_all, mwT_all)

    out = out.reshape(cutn, cut_p, N, C, cut_p)[:, :cs, :, :, :cs]
    out = out.transpose(0, 2, 3, 1, 4).reshape(cutn * N, C, cs, cs)
    return out.astype(x.dtype)


def _fused_cutouts_reference(x, mh_all, mwT_all, *, cutn, cut_size):
    """Dense jnp reference using the SAME folded bf16 matrices / same bf16 intermediates
    (checks the Pallas kernel's data movement & matmuls)."""
    N, C, H, W = x.shape
    cs = cut_size
    cut_p = _round_up(cs, 128)
    h_p = mh_all.shape[1]
    w_p = mwT_all.shape[0] // cutn
    xf = jnp.pad(x.astype(jnp.bfloat16).reshape(N * C, H, W),
                 ((0, 0), (0, h_p - H), (0, w_p - W)))
    mh = mh_all.reshape(cutn, cut_p, h_p)
    mw = mwT_all.reshape(cutn, w_p, cut_p)
    u = jnp.einsum("bhw,nwj->nbhj", xf, mw,
                   preferred_element_type=jnp.float32).astype(jnp.bfloat16)
    out = jnp.einsum("nkh,nbhj->nbkj", mh, u,
                     preferred_element_type=jnp.float32)[:, :, :cs, :cs]
    return out.reshape(cutn * N, C, cs, cs).astype(x.dtype)


# ----------------------------------------------------------------------------
# MakeCutouts module
# ----------------------------------------------------------------------------
class MakeCutouts:
    def __init__(self, cut_size, cutn, seed=0):
        self.cut_size = cut_size
        self.cutn = cutn
        self._rng = np.random.default_rng(seed)   # host RNG for cut geometry

    def _build_cut_matrices(self, h, w):
        """Draw this call's random cut geometry and fold pad+crop+resample into bf16
        matrices, padded to (cut_p, h_p)/(w_p, cut_p) with cut_p a 128-lane multiple."""
        cs = self.cut_size
        cut_p = _round_up(cs, 128)
        h_p = _round_up(h, 16)
        w_p = _round_up(w, 16)
        pad = h // 4                               # T.Pad(input.shape[2] // 4, fill=0)
        sideY, sideX = h + 2 * pad, w + 2 * pad
        max_size = min(sideX, sideY)
        mh_rows, mwT_rows = [], []
        for ch in range(self.cutn):
            if ch > self.cutn - self.cutn // 4:
                oy, ox, sy, sx = 0, 0, sideY, sideX            # whole padded image
            else:
                val = float(np.clip(self._rng.normal(0.8, 0.3), cs / max_size, 1.0))
                size = int(max_size * val)
                ox = int(self._rng.integers(0, abs(sideX - size + 1)))
                oy = int(self._rng.integers(0, abs(sideY - size + 1)))
                sy = sx = size
            mh = _cut_matrix(h, pad, oy, sy, cs)               # (cs, h)
            mwT = _cut_matrix(w, pad, ox, sx, cs).T            # (w, cs)
            mh = np.pad(mh, ((0, cut_p - cs), (0, h_p - h)))   # zero rows / zero cols
            mwT = np.pad(mwT, ((0, w_p - w), (0, cut_p - cs)))
            mh_rows.append(mh)
            mwT_rows.append(mwT)
        mh_all = jnp.asarray(np.concatenate(mh_rows, axis=0), dtype=jnp.bfloat16)
        mwT_all = jnp.asarray(np.concatenate(mwT_rows, axis=0), dtype=jnp.bfloat16)
        return mh_all, mwT_all

    def __call__(self, x, skip_augs=True):
        # TODO(synk): the torchvision random augmentation pipeline (RandomHorizontalFlip,
        # gaussian noise, RandomAffine, RandomPerspective, RandomGrayscale) has no clean
        # Pallas/JAX equivalent; only the skip_augs=True path is implemented.
        n_img, c_ch, h, w = x.shape
        mh_all, mwT_all = self._build_cut_matrices(h, w)
        cs = self.cut_size
        cut_p = _round_up(cs, 128)
        h_p = _round_up(h, 16)
        w_p = _round_up(w, 16)
        cap, is_v7 = _tpu_vmem_and_is_v7()
        budget = _vmem_budget(cap, is_v7)
        b_block = _pick_b_block(n_img * c_ch, h_p, w_p, cut_p, budget,
                                want_two_blocks=is_v7)
        vmem_limit = int(min(cap - 8 * 2 ** 20, budget + 16 * 2 ** 20))
        return _fused_cutouts(x, mh_all, mwT_all,
                              cutn=self.cutn, cut_size=cs,
                              b_block=b_block, vmem_limit_bytes=vmem_limit)


# ----------------------------------------------------------------------------
# Demo
# ----------------------------------------------------------------------------
if __name__ == "__main__":
    key = jax.random.PRNGKey(0)
    x = jax.random.normal(key, (2, 4, 16, 16), dtype=jnp.float32)

    make_cutouts = MakeCutouts(cut_size=8, cutn=8, seed=0)
    out = jax.block_until_ready(make_cutouts(x, skip_augs=True))
    assert out.shape == (8 * 2, 4, 8, 8), out.shape
    assert bool(jnp.all(jnp.isfinite(out)))

    # Cross-check the Pallas kernel against a dense jnp reference using the same matrices.
    mh_all, mwT_all = make_cutouts._build_cut_matrices(16, 16)
    cap, is_v7 = _tpu_vmem_and_is_v7()
    budget = _vmem_budget(cap, is_v7)
    cut_p = _round_up(8, 128)
    bb = _pick_b_block(2 * 4, _round_up(16, 16), _round_up(16, 16), cut_p, budget,
                       want_two_blocks=is_v7)
    vmem_limit = int(min(cap - 8 * 2 ** 20, budget + 16 * 2 ** 20))
    got = _fused_cutouts(x, mh_all, mwT_all, cutn=8, cut_size=8,
                         b_block=bb, vmem_limit_bytes=vmem_limit)
    ref = _fused_cutouts_reference(x, mh_all, mwT_all, cutn=8, cut_size=8)
    np.testing.assert_allclose(np.asarray(got), np.asarray(ref), rtol=2e-2, atol=2e-2)

    print("KERNEL_OK")
</pallas_src>

<mosaic_0001>
module attributes {stable_mosaic.version = 11 : i64} {
  func.func @kernel(%arg0: i32, %arg1: i32, %arg2: memref<128x16xbf16, #tpu.memory_space<vmem>>, %arg3: memref<128x16xbf16, #tpu.memory_space<vmem>>, %arg4: memref<16x128xbf16, #tpu.memory_space<vmem>>, %arg5: memref<128x1024xf32, #tpu.memory_space<vmem>>) attributes {dimension_semantics = [#tpu.dimension_semantics<parallel>, #tpu.dimension_semantics<arbitrary>], iteration_bounds = array<i64: 1, 8>, scalar_prefetch = 0 : i64, scratch_operands = 0 : i64, tpu.core_type = #tpu.core_type<tc>, window_params = [{transform_indices = @transform_0, window_bounds = array<i64: 128, 16>}, {transform_indices = @transform_1, window_bounds = array<i64: 128, 16>}, {transform_indices = @transform_2, window_bounds = array<i64: 16, 128>}, {transform_indices = @transform_3, window_bounds = array<i64: 128, 1024>}]} {
    %c0 = arith.constant 0 : index
    %c0_0 = arith.constant 0 : index
    %0 = vector.load %arg3[%c0, %c0_0] : memref<128x16xbf16, #tpu.memory_space<vmem>>, vector<128x16xbf16>
    %c0_1 = arith.constant 0 : index
    %c0_2 = arith.constant 0 : index
    %1 = vector.load %arg4[%c0_1, %c0_2] : memref<16x128xbf16, #tpu.memory_space<vmem>>, vector<16x128xbf16>
    %c0_3 = arith.constant 0 : index
    %c0_4 = arith.constant 0 : index
    %2 = vector.load %arg2[%c0_3, %c0_4] : memref<128x16xbf16, #tpu.memory_space<vmem>>, vector<16x16xbf16>
    %cst = arith.constant dense<0.000000e+00> : vector<16x128xf32>
    %3 = tpu.matmul %2, %1, %cst {dimension_numbers = #tpu.dot_dimension_numbers<[1], [0], [0], [1], [0, 0, 1, 1], [], []>} : vector<16x16xbf16>, vector<16x128xbf16>, vector<16x128xf32> -> vector<16x128xf32>
    %4 = arith.truncf %3 : vector<16x128xf32> to vector<16x128xbf16>
    %cst_5 = arith.constant dense<0.000000e+00> : vector<128x128xf32>
    %5 = tpu.matmul %0, %4, %cst_5 {dimension_numbers = #tpu.dot_dimension_numbers<[1], [0], [0], [1], [0, 0, 1, 1], [], []>} : vector<128x16xbf16>, vector<16x128xbf16>, vector<128x128xf32> -> vector<128x128xf32>
    %c16 = arith.constant 16 : index
    %c0_6 = arith.constant 0 : index
    %6 = vector.load %arg2[%c16, %c0_6] : memref<128x16xbf16, #tpu.memory_space<vmem>>, vector<16x16xbf16>
    %cst_7 = arith.constant dense<0.000000e+00> : vector<16x128xf32>
    %7 = tpu.matmul %6, %1, %cst_7 {dimension_numbers = #tpu.dot_dimension_numbers<[1], [0], [0], [1], [0, 0, 1, 1], [], []>} : vector<16x16xbf16>, vector<16x128xbf16>, vector<16x128xf32> -> vector<16x128xf32>
    %8 = arith.truncf %7 : vector<16x128xf32> to vector<16x128xbf16>
    %cst_8 = arith.constant dense<0.000000e+00> : vector<128x128xf32>
    %9 = tpu.matmul %0, %8, %cst_8 {dimension_numbers = #tpu.dot_dimension_numbers<[1], [0], [0], [1], [0, 0, 1, 1], [], []>} : vector<128x16xbf16>, vector<16x128xbf16>, vector<128x128xf32> -> vector<128x128xf32>
    %c32 = arith.constant 32 : index
    %c0_9 = arith.constant 0 : index
    %10 = vector.load %arg2[%c32, %c0_9] : memref<128x16xbf16, #tpu.memory_space<vmem>>, vector<16x16xbf16>
    %cst_10 = arith.constant dense<0.000000e+00> : vector<16x128xf32>
    %11 = tpu.matmul %10, %1, %cst_10 {dimension_numbers = #tpu.dot_dimension_numbers<[1], [0], [0], [1], [0, 0, 1, 1], [], []>} : vector<16x16xbf16>, vector<16x128xbf16>, vector<16x128xf32> -> vector<16x128xf32>
    %12 = arith.truncf %11 : vector<16x128xf32> to vector<16x128xbf16>
    %cst_11 = arith.constant dense<0.000000e+00> : vector<128x128xf32>
    %13 = tpu.matmul %0, %12, %cst_11 {dimension_numbers = #tpu.dot_dimension_numbers<[1], [0], [0], [1], [0, 0, 1, 1], [], []>} : vector<128x16xbf16>, vector<16x128xbf16>, vector<128x128xf32> -> vector<128x128xf32>
    %c48 = arith.constant 48 : index
    %c0_12 = arith.constant 0 : index
    %14 = vector.load %arg2[%c48, %c0_12] : memref<128x16xbf16, #tpu.memory_space<vmem>>, vector<16x16xbf16>
    %cst_13 = arith.constant dense<0.000000e+00> : vector<16x128xf32>
    %15 = tpu.matmul %14, %1, %cst_13 {dimension_numbers = #tpu.dot_dimension_numbers<[1], [0], [0], [1], [0, 0, 1, 1], [], []>} : vector<16x16xbf16>, vector<16x128xbf16>, vector<16x128xf32> -> vector<16x128xf32>
    %16 = arith.truncf %15 : vector<16x128xf32> to vector<16x128xbf16>
    %cst_14 = arith.constant dense<0.000000e+00> : vector<128x128xf32>
    %17 = tpu.matmul %0, %16, %cst_14 {dimension_numbers = #tpu.dot_dimension_numbers<[1], [0], [0], [1], [0, 0, 1, 1], [], []>} : vector<128x16xbf16>, vector<16x128xbf16>, vector<128x128xf32> -> vector<128x128xf32>
    %c64 = arith.constant 64 : index
    %c0_15 = arith.constant 0 : index
    %18 = vector.load %arg2[%c64, %c0_15] : memref<128x16xbf16, #tpu.memory_space<vmem>>, vector<16x16xbf16>
    %cst_16 = arith.constant dense<0.000000e+00> : vector<16x128xf32>
    %19 = tpu.matmul %18, %1, %cst_16 {dimension_numbers = #tpu.dot_dimension_numbers<[1], [0], [0], [1], [0, 0, 1, 1], [], []>} : vector<16x16xbf16>, vector<16x128xbf16>, vector<16x128xf32> -> vector<16x128xf32>
    %20 = arith.truncf %19 : vector<16x128xf32> to vector<16x128xbf16>
    %cst_17 = arith.constant dense<0.000000e+00> : vector<128x128xf32>
    %21 = tpu.matmul %0, %20, %cst_17 {dimension_numbers = #tpu.dot_dimension_numbers<[1], [0], [0], [1], [0, 0, 1, 1], [], []>} : vector<128x16xbf16>, vector<16x128xbf16>, vector<128x128xf32> -> vector<128x128xf32>
    %c80 = arith.constant 80 : index
    %c0_18 = arith.constant 0 : index
    %22 = vector.load %arg2[%c80, %c0_18] : memref<128x16xbf16, #tpu.memory_space<vmem>>, vector<16x16xbf16>
    %cst_19 = arith.constant dense<0.000000e+00> : vector<16x128xf32>
    %23 = tpu.matmul %22, %1, %cst_19 {dimension_numbers = #tpu.dot_dimension_numbers<[1], [0], [0], [1], [0, 0, 1, 1], [], []>} : vector<16x16xbf16>, vector<16x128xbf16>, vector<16x128xf32> -> vector<16x128xf32>
    %24 = arith.truncf %23 : vector<16x128xf32> to vector<16x128xbf16>
    %cst_20 = arith.constant dense<0.000000e+00> : vector<128x128xf32>
    %25 = tpu.matmul %0, %24, %cst_20 {dimension_numbers = #tpu.dot_dimension_numbers<[1], [0], [0], [1], [0, 0, 1, 1], [], []>} : vector<128x16xbf16>, vector<16x128xbf16>, vector<128x128xf32> -> vector<128x128xf32>
    %c96 = arith.constant 96 : index
    %c0_21 = arith.constant 0 : index
    %26 = vector.load %arg2[%c96, %c0_21] : memref<128x16xbf16, #tpu.memory_space<vmem>>, vector<16x16xbf16>
    %cst_22 = arith.constant dense<0.000000e+00> : vector<16x128xf32>
    %27 = tpu.matmul %26, %1, %cst_22 {dimension_numbers = #tpu.dot_dimension_numbers<[1], [0], [0], [1], [0, 0, 1, 1], [], []>} : vector<16x16xbf16>, vector<16x128xbf16>, vector<16x128xf32> -> vector<16x128xf32>
    %28 = arith.truncf %27 : vector<16x128xf32> to vector<16x128xbf16>
    %cst_23 = arith.constant dense<0.000000e+00> : vector<128x128xf32>
    %29 = tpu.matmul %0, %28, %cst_23 {dimension_numbers = #tpu.dot_dimension_numbers<[1], [0], [0], [1], [0, 0, 1, 1], [], []>} : vector<128x16xbf16>, vector<16x128xbf16>, vector<128x128xf32> -> vector<128x128xf32>
    %c112 = arith.constant 112 : index
    %c0_24 = arith.constant 0 : index
    %30 = vector.load %arg2[%c112, %c0_24] : memref<128x16xbf16, #tpu.memory_space<vmem>>, vector<16x16xbf16>
    %cst_25 = arith.constant dense<0.000000e+00> : vector<16x128xf32>
    %31 = tpu.matmul %30, %1, %cst_25 {dimension_numbers = #tpu.dot_dimension_numbers<[1], [0], [0], [1], [0, 0, 1, 1], [], []>} : vector<16x16xbf16>, vector<16x128xbf16>, vector<16x128xf32> -> vector<16x128xf32>
    %32 = arith.truncf %31 : vector<16x128xf32> to vector<16x128xbf16>
    %cst_26 = arith.constant dense<0.000000e+00> : vector<128x128xf32>
    %33 = tpu.matmul %0, %32, %cst_26 {dimension_numbers = #tpu.dot_dimension_numbers<[1], [0], [0], [1], [0, 0, 1, 1], [], []>} : vector<128x16xbf16>, vector<16x128xbf16>, vector<128x128xf32> -> vector<128x128xf32>
    %34 = tpu.concatenate %5, %9, %13, %17, %21, %25, %29, %33 in 1 : vector<128x128xf32>, vector<128x128xf32>, vector<128x128xf32>, vector<128x128xf32>, vector<128x128xf32>, vector<128x128xf32>, vector<128x128xf32>, vector<128x128xf32> -> vector<128x1024xf32>
    %c0_27 = arith.constant 0 : index
    %c0_28 = arith.constant 0 : index
    %35 = vector.load %arg5[%c0_27, %c0_28] : memref<128x1024xf32, #tpu.memory_space<vmem>>, vector<128x1024xf32>
    tpu.vector_store %arg5[%c0_27, %c0_28], %34 {strides = array<i32>} : memref<128x1024xf32, #tpu.memory_space<vmem>>, vector<128x1024xf32>,
    return
  }
  func.func @transform_0(%arg0: i32, %arg1: i32) -> (i32, i32) {
    %c0_i32 = arith.constant 0 : i32
    %c0_i32_0 = arith.constant 0 : i32
    return %arg0, %c0_i32 : i32, i32
  }
  func.func @transform_1(%arg0: i32, %arg1: i32) -> (i32, i32) {
    %c0_i32 = arith.constant 0 : i32
    %c0_i32_0 = arith.constant 0 : i32
    return %arg1, %c0_i32 : i32, i32
  }
  func.func @transform_2(%arg0: i32, %arg1: i32) -> (i32, i32) {
    %c0_i32 = arith.constant 0 : i32
    %c0_i32_0 = arith.constant 0 : i32
    return %arg1, %c0_i32 : i32, i32
  }
  func.func @transform_3(%arg0: i32, %arg1: i32) -> (i32, i32) {
    %c0_i32 = arith.constant 0 : i32
    return %arg1, %arg0 : i32, i32
  }
}

</mosaic_0001>

<llo_original>
// kernel: _fused_cutouts.1
$region0: #{_fused_cutouts.1}
  #allocation0 [shape = 'u32[]', space=smem, size = 0x4, offset = 0x4, fixed_abs, tag = 'smem constant byte address 0x4 - core index']
  #allocation1 [shape = 'u32[144,128]{1,0:T(1,128)}', space=vmem, size = 0x12000, scoped, tag = 'internal scratch']
  %s0 = inlined_call_operand.vmem [shape: bf16[128,16], index: 0, kind: input, shape index: {}]
  %s1 = inlined_call_operand.vmem [shape: bf16[1024,16], index: 1, kind: input, shape index: {}]
  %s2 = inlined_call_operand.hbm [shape: bf16[128,128], index: 2, kind: input, shape index: {}]
  %s3 = inlined_call_operand.vmem [shape: f32[1024,1024], index: 3, kind: output, shape index: {}]
  %s4 = sld [smem:[#allocation0]]
  $region49: #{_fused_cutouts.1} parent=0
    _
  %s6 = ssub.s32 1, %s4
  %s7 = scalar_select 0, %s6, %s4
  $region1: #{_fused_cutouts.1} parent=0
    #allocation2 [shape = 'u8[8192]{0}', space=vmem, size = 0x2000, scoped, tag = 'input window, operand 2']
    #allocation3 [shape = 's32[2]{0}', space=sflag, size = 0x8, scoped, tag = 'scoped memory for _fused_cutouts.1']
    %8 = vsyncpa [#allocation3], 0
    %s9 = scalar_lea.sflag [#allocation3], 1
    %10 = vsyncpa %s9, 0
    loop: start=0, step=1, limit=10
    $region2: #{_fused_cutouts.1} parent=1 // loop_pre_header
      _
    $region3: #{_fused_cutouts.1} parent=1 // loop_header
      %s12 = sphi 0, %s16
      %p13 = scmp.ge.s32.totalorder %s12, 10
      %s19 = sphi 0, %s31
      %s20 = sphi 0, %s27
      %s21 = sphi 0, %s19
      %s22 = sphi 0, %s20
      %s23 = sphi 0, %s21
      %s24 = sphi 0, %s22
      %s34 = sphi 0, %s36
      %s37 = sphi 0, %s34
      %s38 = sphi 0, %s37
      %s54 = sphi 0, %s38
      %s60 = sphi 0, %s62
      %s63 = sphi 0, %s60
      %s64 = sphi 0, %s63
      %s80 = sphi 0, %s64
      %s86 = sphi 0, %s88
      %s89 = sphi 0, %s86
      %s90 = sphi 0, %s89
      %s106 = sphi 0, %s90
      %s114 = sphi 0, %s116
      %s117 = sphi 0, %s114
      %s118 = sphi 0, %s117
      %s134 = sphi 0, %s118
    $region4: #{_fused_cutouts.1} parent=1 // loop_header_branch
      %15 = sbr.rel (%p13) target = $region8
    $region5: #{_fused_cutouts.1} parent=1 // loop_body
      %s17 = ssub.s32 %s12, 1
      %s18 = ssub.s32 %s12, 2
      %s25 = sadd.s32 1, %s20
      %p26 = scmp.ge.s32.totalorder %s25, 8
      %s27 = scalar_select %p26, 0, %s25
      %s28 = sadd.s32 1, %s19
      %s29 = scalar_select %p26, %s28, %s19
      %p30 = scmp.ge.s32.totalorder %s29, 1
      %s31 = scalar_select %p30, 0, %s29
      %s32 = ssub.s32 %s19, %s31
      %p33 = scmp.eq.s32.totalorder %s32, 0
      %s35 = sadd.s32 %s34, 1
      %s36 = scalar_select %p33, %s34, %s35
      %p39 = pneg %p33
      %p40 = scmp.eq.s32.totalorder %s12, 7
      %p41 = por %p39, %p40
      %p42 = scmp.ne.s32.totalorder %s34, %s37
      %p43 = scmp.eq.s32.totalorder %s12, 0
      %p44 = por %p42, %p43
      %p45 = scmp.ne.s32.totalorder %s34, %s37
      %p46 = scmp.eq.s32.totalorder %s17, 7
      %p47 = por %p45, %p46
      %p48 = scmp.ne.s32.totalorder %s37, %s38
      %p49 = scmp.eq.s32.totalorder %s17, 0
      %p50 = por %p48, %p49
      %p51 = scmp.ne.s32.totalorder %s37, %s38
      %p52 = scmp.eq.s32.totalorder %s18, 7
      %p53 = por %p51, %p52
      %p55 = scmp.ne.s32.totalorder %s38, %s54
      %p56 = scmp.eq.s32.totalorder %s18, 0
      %p57 = por %p55, %p56
      %s58 = ssub.s32 %s20, %s27
      %p59 = scmp.eq.s32.totalorder %s58, 0
      %s61 = sadd.s32 %s60, 1
      %s62 = scalar_select %p59, %s60, %s61
      %p65 = pneg %p59
      %p66 = scmp.eq.s32.totalorder %s12, 7
      %p67 = por %p65, %p66
      %p68 = scmp.ne.s32.totalorder %s60, %s63
      %p69 = scmp.eq.s32.totalorder %s12, 0
      %p70 = por %p68, %p69
      %p71 = scmp.ne.s32.totalorder %s60, %s63
      %p72 = scmp.eq.s32.totalorder %s17, 7
      %p73 = por %p71, %p72
      %p74 = scmp.ne.s32.totalorder %s63, %s64
      %p75 = scmp.eq.s32.totalorder %s17, 0
      %p76 = por %p74, %p75
      %p77 = scmp.ne.s32.totalorder %s63, %s64
      %p78 = scmp.eq.s32.totalorder %s18, 7
      %p79 = por %p77, %p78
      %p81 = scmp.ne.s32.totalorder %s64, %s80
      %p82 = scmp.eq.s32.totalorder %s18, 0
      %p83 = por %p81, %p82
      %s84 = ssub.s32 %s20, %s27
      %p85 = scmp.eq.s32.totalorder %s84, 0
      %s87 = sadd.s32 %s86, 1
      %s88 = scalar_select %p85, %s86, %s87
      %p91 = pneg %p85
      %p92 = scmp.eq.s32.totalorder %s12, 7
      %p93 = por %p91, %p92
      %p94 = scmp.ne.s32.totalorder %s86, %s89
      %p95 = scmp.eq.s32.totalorder %s12, 0
      %p96 = por %p94, %p95
      %p97 = scmp.ne.s32.totalorder %s86, %s89
      %p98 = scmp.eq.s32.totalorder %s17, 7
      %p99 = por %p97, %p98
      %p100 = scmp.ne.s32.totalorder %s89, %s90
      %p101 = scmp.eq.s32.totalorder %s17, 0
      %p102 = por %p100, %p101
      %p103 = scmp.ne.s32.totalorder %s89, %s90
      %p104 = scmp.eq.s32.totalorder %s18, 7
      %p105 = por %p103, %p104
      %p107 = scmp.ne.s32.totalorder %s90, %s106
      %p108 = scmp.eq.s32.totalorder %s18, 0
      %p109 = por %p107, %p108
      %s110 = ssub.s32 %s20, %s27
      %s111 = ssub.s32 %s19, %s31
      %s112 = sor.u32 %s110, %s111
      %p113 = scmp.eq.s32.totalorder %s112, 0
      %s115 = sadd.s32 %s114, 1
      %s116 = scalar_select %p113, %s114, %s115
      %p119 = pneg %p113
      %p120 = scmp.eq.s32.totalorder %s12, 7
      %p121 = por %p119, %p120
      %p122 = scmp.ne.s32.totalorder %s114, %s117
      %p123 = scmp.eq.s32.totalorder %s12, 0
      %p124 = por %p122, %p123
      %p125 = scmp.ne.s32.totalorder %s114, %s117
      %p126 = scmp.eq.s32.totalorder %s17, 7
      %p127 = por %p125, %p126
      %p128 = scmp.ne.s32.totalorder %s117, %s118
      %p129 = scmp.eq.s32.totalorder %s17, 0
      %p130 = por %p128, %p129
      %p131 = scmp.ne.s32.totalorder %s117, %s118
      %p132 = scmp.eq.s32.totalorder %s18, 7
      %p133 = por %p131, %p132
      %p135 = scmp.ne.s32.totalorder %s118, %s134
      %p136 = scmp.eq.s32.totalorder %s18, 0
      %p137 = por %p135, %p136
      %p138 = scmp.le.s32.totalorder 1, %s12
      %p139 = scmp.lt.s32.totalorder %s12, 9
      %p140 = pnand %p138, %p139
      %p141 = pneg %p140
      // Predicated region
      $region9: #{_fused_cutouts.1} parent=5 // pred_check
        _
      $region10: #{_fused_cutouts.1} parent=5 // pred_check_branch
        %143 = sbr.rel (%p140) target = $region12
      $region11: #{_fused_cutouts.1} parent=5 // pred_region
        %s144 = ssub.s32 %s12, 1
        // Predicated region
        $region13: #{_fused_cutouts.1} parent=11 // pred_check
          %p145 = pneg %p50
        $region14: #{_fused_cutouts.1} parent=11 // pred_check_branch
          %147 = sbr.rel (%p145) target = $region16
        $region15: #{_fused_cutouts.1} parent=11 // pred_region
          %s148 = smul.u32 16, %s21
          %p149 = scmp.lt.s32.totalorder %s148, 15
          %s150 = scalar_select %p149, %s148, 15
          %s151 = smul.addr %s150, 4
          %s152 = scalar_lea.vmem %s0, %s151
          %s153 = smul.u32 16, %s21
        $region16: #{_fused_cutouts.1} parent=11 // pred_fallthru
          _
      $region12: #{_fused_cutouts.1} parent=5 // pred_fallthru
        _
      %p154 = scmp.lt.s32.totalorder %s12, 8
      // Predicated region
      $region17: #{_fused_cutouts.1} parent=5 // pred_check
        %p155 = pneg %p154
      $region18: #{_fused_cutouts.1} parent=5 // pred_check_branch
        %157 = sbr.rel (%p155) target = $region20
      $region19: #{_fused_cutouts.1} parent=5 // pred_region
        // Predicated region
        $region21: #{_fused_cutouts.1} parent=19 // pred_check
          %p158 = pneg %p70
        $region22: #{_fused_cutouts.1} parent=19 // pred_check_branch
          %160 = sbr.rel (%p158) target = $region24
        $region23: #{_fused_cutouts.1} parent=19 // pred_region
          %s161 = smul.u32 16, %s20
          %p162 = scmp.lt.s32.totalorder %s161, 127
          %s163 = scalar_select %p162, %s161, 127
          %s164 = smul.addr %s163, 4
          %s165 = scalar_lea.vmem %s1, %s164
          %s166 = smul.u32 16, %s20
        $region24: #{_fused_cutouts.1} parent=19 // pred_fallthru
          _
        // Predicated region
        $region25: #{_fused_cutouts.1} parent=19 // pred_check
          %p167 = pneg %p96
        $region26: #{_fused_cutouts.1} parent=19 // pred_check_branch
          %169 = sbr.rel (%p167) target = $region28
        $region27: #{_fused_cutouts.1} parent=19 // pred_region
          %s170 = sand.u32 %s86, 1
          %s171 = scalar_lea.sflag [#allocation3], %s170
          %s172 = sand.u32 %s86, 1
          %s173 = smul.addr %s172, 8
          %s174 = scalar_lea.vmem [#allocation2], %s173
          %s175 = smul.u32 2, %s20
          %s177 = ssub.s32 128, 128
          %178 = vsyncadd %s171, %s177
          %s179 = smul.addr %s175, 64
          %s180 = scalar_lea.hbm %s2, %s179
          %s181 = sshll.u32 %s174, 4
          %s182 = int_to_ptr.vmem [resolvable:$true] %s181
          %187 = dma.hbm_to_vmem [thread:$0]  %s180, 128, %s182, %s171, 64, 64, 4
        $region28: #{_fused_cutouts.1} parent=19 // pred_fallthru
          _
      $region20: #{_fused_cutouts.1} parent=5 // pred_fallthru
        _
      %p188 = scmp.le.s32.totalorder 1, %s12
      %p189 = scmp.lt.s32.totalorder %s12, 9
      %p190 = pnand %p188, %p189
      %p191 = pneg %p190
      // Predicated region
      $region29: #{_fused_cutouts.1} parent=5 // pred_check
        _
      $region30: #{_fused_cutouts.1} parent=5 // pred_check_branch
        %193 = sbr.rel (%p190) target = $region32
      $region31: #{_fused_cutouts.1} parent=5 // pred_region
        %s194 = ssub.s32 %s12, 1
        %s195 = sand.u32 %s89, 1
        %s196 = scalar_lea.sflag [#allocation3], %s195
        %s197 = sand.u32 %s89, 1
        %s198 = smul.addr %s197, 8
        %s199 = scalar_lea.vmem [#allocation2], %s198
        // Predicated region
        $region33: #{_fused_cutouts.1} parent=31 // pred_check
          %p200 = pneg %p102
        $region34: #{_fused_cutouts.1} parent=31 // pred_check_branch
          %202 = sbr.rel (%p200) target = $region36
        $region35: #{_fused_cutouts.1} parent=31 // pred_region
          %203 = dma.done %s196, 128
        $region36: #{_fused_cutouts.1} parent=31 // pred_fallthru
          _
        %s204 = smul.u32 16, %s21
        %p205 = scmp.lt.s32.totalorder %s204, 15
        %s206 = scalar_select %p205, %s204, 15
        %s207 = smul.addr %s206, 4
        %s208 = scalar_lea.vmem %s0, %s207
        %p209 = pneg %p50
        %p210 = pneg %p47
        %s211 = smul.u32 16, %s22
        %p212 = scmp.lt.s32.totalorder %s211, 127
        %s213 = scalar_select %p212, %s211, 127
        %s214 = smul.addr %s213, 4
        %s215 = scalar_lea.vmem %s1, %s214
        %p216 = pneg %p76
        %p217 = pneg %p73
        %s218 = sand.u32 %s89, 1
        %s219 = scalar_lea.sflag [#allocation3], %s218
        %s220 = sand.u32 %s89, 1
        %s221 = smul.addr %s220, 8
        %s222 = scalar_lea.vmem [#allocation2], %s221
        %p223 = pneg %p102
        %p224 = pneg %p99
        %p225 = pneg %p130
        %p226 = pneg %p127
        %s227 = smul.u32 16, %s22
        %s228 = smul.u32 8, %s21
        %p229 = scmp.lt.s32.totalorder %s227, 127
        %s230 = scalar_select %p229, %s227, 127
        %p231 = scmp.lt.s32.totalorder %s228, 7
        %s232 = scalar_select %p231, %s228, 7
        %s233 = smul.addr %s230, 8
        %s234 = sadd.s32 %s232, %s233
        %s235 = smul.addr %s234, 8
        %s236 = scalar_lea.vmem %s3, %s235
        %s237 = smul.u32 16, %s21
        %p238 = scmp.lt.s32.totalorder %s237, 15
        %s239 = scalar_select %p238, %s237, 15
        %s240 = smul.addr %s239, 4
        %s241 = scalar_lea.vmem %s0, %s240
        %s242 = smul.u32 16, %s21
        %s243 = smul.u32 16, %s22
        %p244 = scmp.lt.s32.totalorder %s243, 127
        %s245 = scalar_select %p244, %s243, 127
        %s246 = smul.addr %s245, 4
        %s247 = scalar_lea.vmem %s1, %s246
        %s248 = smul.u32 16, %s22
        %s249 = smul.u32 2, %s22
        %s250 = smul.u32 16, %s22
        %s251 = smul.u32 8, %s21
        %p252 = scmp.lt.s32.totalorder %s250, 127
        %s253 = scalar_select %p252, %s250, 127
        %p254 = scmp.lt.s32.totalorder %s251, 7
        %s255 = scalar_select %p254, %s251, 7
        %s256 = smul.addr %s253, 8
        %s257 = sadd.s32 %s255, %s256
        %s258 = smul.addr %s257, 8
        %s259 = scalar_lea.vmem %s3, %s258
        %s260 = smul.u32 16, %s22
        %s261 = smul.u32 8, %s21
        %v263 = vld [vmem:[%s247] sm:$0xf]
        %v264 = vld [vmem:[%s247 + $0x4] sm:$0xf]
        %v265 = vld [vmem:[%s247 + $0x8] sm:$0xf]
        %v266 = vld [vmem:[%s247 + $0xc] sm:$0xf]
        %v267 = vld [vmem:[%s247 + $0x10] sm:$0xf]
        %v268 = vld [vmem:[%s247 + $0x14] sm:$0xf]
        %v269 = vld [vmem:[%s247 + $0x18] sm:$0xf]
        %v270 = vld [vmem:[%s247 + $0x1c] sm:$0xf]
        %v271 = vld [vmem:[%s247 + $0x20] sm:$0xf]
        %v272 = vld [vmem:[%s247 + $0x24] sm:$0xf]
        %v273 = vld [vmem:[%s247 + $0x28] sm:$0xf]
        %v274 = vld [vmem:[%s247 + $0x2c] sm:$0xf]
        %v275 = vld [vmem:[%s247 + $0x30] sm:$0xf]
        %v276 = vld [vmem:[%s247 + $0x34] sm:$0xf]
        %v277 = vld [vmem:[%s247 + $0x38] sm:$0xf]
        %v278 = vld [vmem:[%s247 + $0x3c] sm:$0xf]
        %v279 = vld [vmem:[%s199] sm:$0xf]
        %v280 = vld [vmem:[%s199 + $0x4] sm:$0xf]
        %v281 = vld [vmem:[%s241] sm:$0xf]
        %v282 = vld [vmem:[%s241 + $0x4] sm:$0xf]
        %v285 = vunpack.c.l.b16 %v281
        %v286 = vunpack.c.l.b16 %v282
        %v287 = vpack.c.b16 %v286, %v285
        %v290 = vunpack.c.l.b16 %v279
        %v291 = vunpack.c.l.b16 %v280
        %v292 = vpack.c.b16 %v291, %v290
        %vm294 = vcmask 130048
        %v296 = vsel %vm294, %v287, 0
        %298 = vmatprep.subr.bf16.mxu0 0
        %299 = vmatpush1.bf16.msra.mxu0 0
        %300 = vmatprep.subr.bf16.mxu0 0
        %301 = vmatpush1.bf16.msra.mxu0 0
        %302 = vmatprep.subr.bf16.mxu0 0
        %303 = vmatpush1.bf16.msra.mxu0 0
        %304 = vmatprep.subr.bf16.mxu0 0
        %305 = vmatpush1.bf16.msra.mxu0 0
        %306 = vmatprep.subr.bf16.mxu0 0
        %307 = vmatpush1.bf16.msra.mxu0 0
        %308 = vmatprep.subr.bf16.mxu0 0
        %309 = vmatpush1.bf16.msra.mxu0 0
        %310 = vmatprep.subr.bf16.mxu0 0
        %311 = vmatpush1.bf16.msra.mxu0 0
        %312 = vmatprep.subr.bf16.mxu0 0
        %313 = vmatpush1.bf16.msra.mxu0 %v292
        %314 = vmatprep.subr.bf16.mxu0 0
        %315 = vmatpush2.bf16.msra.mxu0 0
        %316 = vmatprep.subr.bf16.mxu0 0
        %317 = vmatpush2.bf16.msra.mxu0 0
        %318 = vmatprep.subr.bf16.mxu0 0
        %319 = vmatpush2.bf16.msra.mxu0 0
        %320 = vmatprep.subr.bf16.mxu0 0
        %321 = vmatpush2.bf16.msra.mxu0 0
        %322 = vmatprep.subr.bf16.mxu0 0
        %323 = vmatpush2.bf16.msra.mxu0 0
        %324 = vmatprep.subr.bf16.mxu0 0
        %325 = vmatpush2.bf16.msra.mxu0 0
        %326 = vmatprep.subr.bf16.mxu0 0
        %327 = vmatpush2.bf16.msra.mxu0 0
        %328 = vmatprep.subr.bf16.mxu0 0
        %329 = vmatpush2.bf16.msra.mxu0 0
        %330 = vmatprep.mubr.bf16.mxu0 0
        %331 = vmatmul.mubr.bf16.gmra.mxu0 %v296
        %v332 = vpop.f32.mrf.mxu0
        %v333 = vadd.f32 0.0, %v332
        %v334 = vpop.f32.mrf.mxu0
        %v335 = vpop.f32.mrf.mxu0
        %v336 = vadd.f32 0.0, %v335
        %v337 = vpop.f32.mrf.mxu0
        %338 = vdwg.mxu0
        %v339 = vpack.c.bf16 %v336, %v333
        %v356 = vunpack.c.l.b16 %v263
        %v357 = vunpack.c.l.b16 %v264
        %v358 = vunpack.c.l.b16 %v265
        %v359 = vunpack.c.l.b16 %v266
        %v360 = vunpack.c.l.b16 %v267
        %v361 = vunpack.c.l.b16 %v268
        %v362 = vunpack.c.l.b16 %v269
        %v363 = vunpack.c.l.b16 %v270
        %v364 = vunpack.c.l.b16 %v271
        %v365 = vunpack.c.l.b16 %v272
        %v366 = vunpack.c.l.b16 %v273
        %v367 = vunpack.c.l.b16 %v274
        %v368 = vunpack.c.l.b16 %v275
        %v369 = vunpack.c.l.b16 %v276
        %v370 = vunpack.c.l.b16 %v277
        %v371 = vunpack.c.l.b16 %v278
        %v372 = vpack.c.b16 %v357, %v356
        %v373 = vpack.c.b16 %v359, %v358
        %v374 = vpack.c.b16 %v361, %v360
        %v375 = vpack.c.b16 %v363, %v362
        %v376 = vpack.c.b16 %v365, %v364
        %v377 = vpack.c.b16 %v367, %v366
        %v378 = vpack.c.b16 %v369, %v368
        %v379 = vpack.c.b16 %v371, %v370
        %v381 = vsel %vm294, %v372, 0
        %v384 = vsel %vm294, %v373, 0
        %v387 = vsel %vm294, %v374, 0
        %v390 = vsel %vm294, %v375, 0
        %v393 = vsel %vm294, %v376, 0
        %v396 = vsel %vm294, %v377, 0
        %v399 = vsel %vm294, %v378, 0
        %v402 = vsel %vm294, %v379, 0
        %404 = vmatprep.subr.bf16.mxu0 0
        %405 = vmatpush1.bf16.msra.mxu0 0
        %406 = vmatprep.subr.bf16.mxu0 0
        %407 = vmatpush1.bf16.msra.mxu0 0
        %408 = vmatprep.subr.bf16.mxu0 0
        %409 = vmatpush1.bf16.msra.mxu0 0
        %410 = vmatprep.subr.bf16.mxu0 0
        %411 = vmatpush1.bf16.msra.mxu0 0
        %412 = vmatprep.subr.bf16.mxu0 0
        %413 = vmatpush1.bf16.msra.mxu0 0
        %414 = vmatprep.subr.bf16.mxu0 0
        %415 = vmatpush1.bf16.msra.mxu0 0
        %416 = vmatprep.subr.bf16.mxu0 0
        %417 = vmatpush1.bf16.msra.mxu0 0
        %418 = vmatprep.subr.bf16.mxu0 0
        %419 = vmatpush1.bf16.msra.mxu0 %v339
        %420 = vmatprep.subr.bf16.mxu0 0
        %421 = vmatpush2.bf16.msra.mxu0 0
        %422 = vmatprep.subr.bf16.mxu0 0
        %423 = vmatpush2.bf16.msra.mxu0 0
        %424 = vmatprep.subr.bf16.mxu0 0
        %425 = vmatpush2.bf16.msra.mxu0 0
        %426 = vmatprep.subr.bf16.mxu0 0
        %427 = vmatpush2.bf16.msra.mxu0 0
        %428 = vmatprep.subr.bf16.mxu0 0
        %429 = vmatpush2.bf16.msra.mxu0 0
        %430 = vmatprep.subr.bf16.mxu0 0
        %431 = vmatpush2.bf16.msra.mxu0 0
        %432 = vmatprep.subr.bf16.mxu0 0
        %433 = vmatpush2.bf16.msra.mxu0 0
        %434 = vmatprep.subr.bf16.mxu0 0
        %435 = vmatpush2.bf16.msra.mxu0 0
        %436 = vmatprep.mubr.bf16.mxu0 0
        %437 = vmatmul.mubr.bf16.gmra.mxu0 %v381
        %v438 = vpop.f32.mrf.mxu0
        %v439 = vadd.f32 0.0, %v438
        %v440 = vpop.f32.mrf.mxu0
        %v441 = vpop.f32.mrf.mxu0
        %v442 = vadd.f32 0.0, %v441
        %v443 = vpop.f32.mrf.mxu0
        %444 = vmatprep.mubr.bf16.mxu0 0
        %445 = vmatmul.mubr.bf16.gmra.mxu0 %v384
        %v446 = vpop.f32.mrf.mxu0
        %v447 = vadd.f32 0.0, %v446
        %v448 = vpop.f32.mrf.mxu0
        %v449 = vpop.f32.mrf.mxu0
        %v450 = vadd.f32 0.0, %v449
        %v451 = vpop.f32.mrf.mxu0
        %452 = vmatprep.mubr.bf16.mxu0 0
        %453 = vmatmul.mubr.bf16.gmra.mxu0 %v387
        %v454 = vpop.f32.mrf.mxu0
        %v455 = vadd.f32 0.0, %v454
        %v456 = vpop.f32.mrf.mxu0
        %v457 = vpop.f32.mrf.mxu0
        %v458 = vadd.f32 0.0, %v457
        %v459 = vpop.f32.mrf.mxu0
        %460 = vmatprep.mubr.bf16.mxu0 0
        %461 = vmatmul.mubr.bf16.gmra.mxu0 %v390
        %v462 = vpop.f32.mrf.mxu0
        %v463 = vadd.f32 0.0, %v462
        %v464 = vpop.f32.mrf.mxu0
        %v465 = vpop.f32.mrf.mxu0
        %v466 = vadd.f32 0.0, %v465
        %v467 = vpop.f32.mrf.mxu0
        %468 = vmatprep.mubr.bf16.mxu0 0
        %469 = vmatmul.mubr.bf16.gmra.mxu0 %v393
        %v470 = vpop.f32.mrf.mxu0
        %v471 = vadd.f32 0.0, %v470
        %v472 = vpop.f32.mrf.mxu0
        %v473 = vpop.f32.mrf.mxu0
        %v474 = vadd.f32 0.0, %v473
        %v475 = vpop.f32.mrf.mxu0
        %476 = vmatprep.mubr.bf16.mxu0 0
        %477 = vmatmul.mubr.bf16.gmra.mxu0 %v396
        %v478 = vpop.f32.mrf.mxu0
        %v479 = vadd.f32 0.0, %v478
        %v480 = vpop.f32.mrf.mxu0
        %v481 = vpop.f32.mrf.mxu0
        %v482 = vadd.f32 0.0, %v481
        %v483 = vpop.f32.mrf.mxu0
        %484 = vmatprep.mubr.bf16.mxu0 0
        %485 = vmatmul.mubr.bf16.gmra.mxu0 %v399
        %v486 = vpop.f32.mrf.mxu0
        %v487 = vadd.f32 0.0, %v486
        %v488 = vpop.f32.mrf.mxu0
        %v489 = vpop.f32.mrf.mxu0
        %v490 = vadd.f32 0.0, %v489
        %v491 = vpop.f32.mrf.mxu0
        %492 = vmatprep.mubr.bf16.mxu0 0
        %493 = vmatmul.mubr.bf16.gmra.mxu0 %v402
        %v494 = vpop.f32.mrf.mxu0
        %v495 = vadd.f32 0.0, %v494
        %v496 = vpop.f32.mrf.mxu0
        %v497 = vpop.f32.mrf.mxu0
        %v498 = vadd.f32 0.0, %v497
        %v499 = vpop.f32.mrf.mxu0
        %500 = vdwg.mxu0
        %v501 = vld [vmem:[%s241 + $0x8] sm:$0xf]
        %v502 = vld [vmem:[%s241 + $0xc] sm:$0xf]
        %v505 = vunpack.c.l.b16 %v501
        %v506 = vunpack.c.l.b16 %v502
        %v507 = vpack.c.b16 %v506, %v505
        %v509 = vsel %vm294, %v507, 0
        %511 = vmatprep.subr.bf16.mxu0 0
        %512 = vmatpush1.bf16.msra.mxu0 0
        %513 = vmatprep.subr.bf16.mxu0 0
        %514 = vmatpush1.bf16.msra.mxu0 0
        %515 = vmatprep.subr.bf16.mxu0 0
        %516 = vmatpush1.bf16.msra.mxu0 0
        %517 = vmatprep.subr.bf16.mxu0 0
        %518 = vmatpush1.bf16.msra.mxu0 0
        %519 = vmatprep.subr.bf16.mxu0 0
        %520 = vmatpush1.bf16.msra.mxu0 0
        %521 = vmatprep.subr.bf16.mxu0 0
        %522 = vmatpush1.bf16.msra.mxu0 0
        %523 = vmatprep.subr.bf16.mxu0 0
        %524 = vmatpush1.bf16.msra.mxu0 0
        %525 = vmatprep.subr.bf16.mxu0 0
        %526 = vmatpush1.bf16.msra.mxu0 %v292
        %527 = vmatprep.subr.bf16.mxu0 0
        %528 = vmatpush2.bf16.msra.mxu0 0
        %529 = vmatprep.subr.bf16.mxu0 0
        %530 = vmatpush2.bf16.msra.mxu0 0
        %531 = vmatprep.subr.bf16.mxu0 0
        %532 = vmatpush2.bf16.msra.mxu0 0
        %533 = vmatprep.subr.bf16.mxu0 0
        %534 = vmatpush2.bf16.msra.mxu0 0
        %535 = vmatprep.subr.bf16.mxu0 0
        %536 = vmatpush2.bf16.msra.mxu0 0
        %537 = vmatprep.subr.bf16.mxu0 0
        %538 = vmatpush2.bf16.msra.mxu0 0
        %539 = vmatprep.subr.bf16.mxu0 0
        %540 = vmatpush2.bf16.msra.mxu0 0
        %541 = vmatprep.subr.bf16.mxu0 0
        %542 = vmatpush2.bf16.msra.mxu0 0
        %543 = vmatprep.mubr.bf16.mxu0 0
        %544 = vmatmul.mubr.bf16.gmra.mxu0 %v509
        %v545 = vpop.f32.mrf.mxu0
        %v546 = vadd.f32 0.0, %v545
        %v547 = vpop.f32.mrf.mxu0
        %v548 = vpop.f32.mrf.mxu0
        %v549 = vadd.f32 0.0, %v548
        %v550 = vpop.f32.mrf.mxu0
        %551 = vdwg.mxu0
        %v552 = vpack.c.bf16 %v549, %v546
        %553 = vmatprep.subr.bf16.mxu0 0
        %554 = vmatpush1.bf16.msra.mxu0 0
        %555 = vmatprep.subr.bf16.mxu0 0
        %556 = vmatpush1.bf16.msra.mxu0 0
        %557 = vmatprep.subr.bf16.mxu0 0
        %558 = vmatpush1.bf16.msra.mxu0 0
        %559 = vmatprep.subr.bf16.mxu0 0
        %560 = vmatpush1.bf16.msra.mxu0 0
        %561 = vmatprep.subr.bf16.mxu0 0
        %562 = vmatpush1.bf16.msra.mxu0 0
        %563 = vmatprep.subr.bf16.mxu0 0
        %564 = vmatpush1.bf16.msra.mxu0 0
        %565 = vmatprep.subr.bf16.mxu0 0
        %566 = vmatpush1.bf16.msra.mxu0 0
        %567 = vmatprep.subr.bf16.mxu0 0
        %568 = vmatpush1.bf16.msra.mxu0 %v552
        %569 = vmatprep.subr.bf16.mxu0 0
        %570 = vmatpush2.bf16.msra.mxu0 0
        %571 = vmatprep.subr.bf16.mxu0 0
        %572 = vmatpush2.bf16.msra.mxu0 0
        %573 = vmatprep.subr.bf16.mxu0 0
        %574 = vmatpush2.bf16.msra.mxu0 0
        %575 = vmatprep.subr.bf16.mxu0 0
        %576 = vmatpush2.bf16.msra.mxu0 0
        %577 = vmatprep.subr.bf16.mxu0 0
        %578 = vmatpush2.bf16.msra.mxu0 0
        %579 = vmatprep.subr.bf16.mxu0 0
        %580 = vmatpush2.bf16.msra.mxu0 0
        %581 = vmatprep.subr.bf16.mxu0 0
        %582 = vmatpush2.bf16.msra.mxu0 0
        %583 = vmatprep.subr.bf16.mxu0 0
        %584 = vmatpush2.bf16.msra.mxu0 0
        %585 = vmatprep.mubr.bf16.mxu0 0
        %586 = vmatmul.mubr.bf16.gmra.mxu0 %v381
        %v587 = vpop.f32.mrf.mxu0
        %v588 = vadd.f32 0.0, %v587
        %v589 = vpop.f32.mrf.mxu0
        %v590 = vpop.f32.mrf.mxu0
        %v591 = vadd.f32 0.0, %v590
        %v592 = vpop.f32.mrf.mxu0
        %593 = vmatprep.mubr.bf16.mxu0 0
        %594 = vmatmul.mubr.bf16.gmra.mxu0 %v384
        %v595 = vpop.f32.mrf.mxu0
        %v596 = vadd.f32 0.0, %v595
        %v597 = vpop.f32.mrf.mxu0
        %v598 = vpop.f32.mrf.mxu0
        %v599 = vadd.f32 0.0, %v598
        %v600 = vpop.f32.mrf.mxu0
        %601 = vmatprep.mubr.bf16.mxu0 0
        %602 = vmatmul.mubr.bf16.gmra.mxu0 %v387
        %v603 = vpop.f32.mrf.mxu0
        %v604 = vadd.f32 0.0, %v603
        %v605 = vpop.f32.mrf.mxu0
        %v606 = vpop.f32.mrf.mxu0
        %v607 = vadd.f32 0.0, %v606
        %v608 = vpop.f32.mrf.mxu0
        %609 = vmatprep.mubr.bf16.mxu0 0
        %610 = vmatmul.mubr.bf16.gmra.mxu0 %v390
        %v611 = vpop.f32.mrf.mxu0
        %v612 = vadd.f32 0.0, %v611
        %v613 = vpop.f32.mrf.mxu0
        %v614 = vpop.f32.mrf.mxu0
        %v615 = vadd.f32 0.0, %v614
        %v616 = vpop.f32.mrf.mxu0
        %617 = vmatprep.mubr.bf16.mxu0 0
        %618 = vmatmul.mubr.bf16.gmra.mxu0 %v393
        %v619 = vpop.f32.mrf.mxu0
        %v620 = vadd.f32 0.0, %v619
        %v621 = vpop.f32.mrf.mxu0
        %v622 = vpop.f32.mrf.mxu0
        %v623 = vadd.f32 0.0, %v622
        %v624 = vpop.f32.mrf.mxu0
        %625 = vmatprep.mubr.bf16.mxu0 0
        %626 = vmatmul.mubr.bf16.gmra.mxu0 %v396
        %v627 = vpop.f32.mrf.mxu0
        %v628 = vadd.f32 0.0, %v627
        %v629 = vpop.f32.mrf.mxu0
        %v630 = vpop.f32.mrf.mxu0
        %v631 = vadd.f32 0.0, %v630
        %v632 = vpop.f32.mrf.mxu0
        %633 = vmatprep.mubr.bf16.mxu0 0
        %634 = vmatmul.mubr.bf16.gmra.mxu0 %v399
        %v635 = vpop.f32.mrf.mxu0
        %v636 = vadd.f32 0.0, %v635
        %v637 = vpop.f32.mrf.mxu0
        %v638 = vpop.f32.mrf.mxu0
        %v639 = vadd.f32 0.0, %v638
        %v640 = vpop.f32.mrf.mxu0
        %641 = vmatprep.mubr.bf16.mxu0 0
        %642 = vmatmul.mubr.bf16.gmra.mxu0 %v402
        %v643 = vpop.f32.mrf.mxu0
        %v644 = vadd.f32 0.0, %v643
        %v645 = vpop.f32.mrf.mxu0
        %v646 = vpop.f32.mrf.mxu0
        %v647 = vadd.f32 0.0, %v646
        %v648 = vpop.f32.mrf.mxu0
        %649 = vdwg.mxu0
        %v650 = vld [vmem:[%s241 + $0x10] sm:$0xf]
        %v651 = vld [vmem:[%s241 + $0x14] sm:$0xf]
        %v654 = vunpack.c.l.b16 %v650
        %v655 = vunpack.c.l.b16 %v651
        %v656 = vpack.c.b16 %v655, %v654
        %v658 = vsel %vm294, %v656, 0
        %660 = vmatprep.subr.bf16.mxu0 0
        %661 = vmatpush1.bf16.msra.mxu0 0
        %662 = vmatprep.subr.bf16.mxu0 0
        %663 = vmatpush1.bf16.msra.mxu0 0
        %664 = vmatprep.subr.bf16.mxu0 0
        %665 = vmatpush1.bf16.msra.mxu0 0
        %666 = vmatprep.subr.bf16.mxu0 0
        %667 = vmatpush1.bf16.msra.mxu0 0
        %668 = vmatprep.subr.bf16.mxu0 0
        %669 = vmatpush1.bf16.msra.mxu0 0
        %670 = vmatprep.subr.bf16.mxu0 0
        %671 = vmatpush1.bf16.msra.mxu0 0
        %672 = vmatprep.subr.bf16.mxu0 0
        %673 = vmatpush1.bf16.msra.mxu0 0
        %674 = vmatprep.subr.bf16.mxu0 0
        %675 = vmatpush1.bf16.msra.mxu0 %v292
        %676 = vmatprep.subr.bf16.mxu0 0
        %677 = vmatpush2.bf16.msra.mxu0 0
        %678 = vmatprep.subr.bf16.mxu0 0
        %679 = vmatpush2.bf16.msra.mxu0 0
        %680 = vmatprep.subr.bf16.mxu0 0
        %681 = vmatpush2.bf16.msra.mxu0 0
        %682 = vmatprep.subr.bf16.mxu0 0
        %683 = vmatpush2.bf16.msra.mxu0 0
        %684 = vmatprep.subr.bf16.mxu0 0
        %685 = vmatpush2.bf16.msra.mxu0 0
        %686 = vmatprep.subr.bf16.mxu0 0
        %687 = vmatpush2.bf16.msra.mxu0 0
        %688 = vmatprep.subr.bf16.mxu0 0
        %689 = vmatpush2.bf16.msra.mxu0 0
        %690 = vmatprep.subr.bf16.mxu0 0
        %691 = vmatpush2.bf16.msra.mxu0 0
        %692 = vmatprep.mubr.bf16.mxu0 0
        %693 = vmatmul.mubr.bf16.gmra.mxu0 %v658
        %v694 = vpop.f32.mrf.mxu0
        %v695 = vadd.f32 0.0, %v694
        %v696 = vpop.f32.mrf.mxu0
        %v697 = vpop.f32.mrf.mxu0
        %v698 = vadd.f32 0.0, %v697
        %v699 = vpop.f32.mrf.mxu0
        %700 = vdwg.mxu0
        %v701 = vpack.c.bf16 %v698, %v695
        %702 = vmatprep.subr.bf16.mxu0 0
        %703 = vmatpush1.bf16.msra.mxu0 0
        %704 = vmatprep.subr.bf16.mxu0 0
        %705 = vmatpush1.bf16.msra.mxu0 0
        %706 = vmatprep.subr.bf16.mxu0 0
        %707 = vmatpush1.bf16.msra.mxu0 0
        %708 = vmatprep.subr.bf16.mxu0 0
        %709 = vmatpush1.bf16.msra.mxu0 0
        %710 = vmatprep.subr.bf16.mxu0 0
        %711 = vmatpush1.bf16.msra.mxu0 0
        %712 = vmatprep.subr.bf16.mxu0 0
        %713 = vmatpush1.bf16.msra.mxu0 0
        %714 = vmatprep.subr.bf16.mxu0 0
        %715 = vmatpush1.bf16.msra.mxu0 0
        %716 = vmatprep.subr.bf16.mxu0 0
        %717 = vmatpush1.bf16.msra.mxu0 %v701
        %718 = vmatprep.subr.bf16.mxu0 0
        %719 = vmatpush2.bf16.msra.mxu0 0
        %720 = vmatprep.subr.bf16.mxu0 0
        %721 = vmatpush2.bf16.msra.mxu0 0
        %722 = vmatprep.subr.bf16.mxu0 0
        %723 = vmatpush2.bf16.msra.mxu0 0
        %724 = vmatprep.subr.bf16.mxu0 0
        %725 = vmatpush2.bf16.msra.mxu0 0
        %726 = vmatprep.subr.bf16.mxu0 0
        %727 = vmatpush2.bf16.msra.mxu0 0
        %728 = vmatprep.subr.bf16.mxu0 0
        %729 = vmatpush2.bf16.msra.mxu0 0
        %730 = vmatprep.subr.bf16.mxu0 0
        %731 = vmatpush2.bf16.msra.mxu0 0
        %732 = vmatprep.subr.bf16.mxu0 0
        %733 = vmatpush2.bf16.msra.mxu0 0
        %734 = vmatprep.mubr.bf16.mxu0 0
        %735 = vmatmul.mubr.bf16.gmra.mxu0 %v381
        %v736 = vpop.f32.mrf.mxu0
        %v737 = vadd.f32 0.0, %v736
        %v738 = vpop.f32.mrf.mxu0
        %v739 = vpop.f32.mrf.mxu0
        %v740 = vadd.f32 0.0, %v739
        %v741 = vpop.f32.mrf.mxu0
        %742 = vmatprep.mubr.bf16.mxu0 0
        %743 = vmatmul.mubr.bf16.gmra.mxu0 %v384
        %v744 = vpop.f32.mrf.mxu0
        %v745 = vadd.f32 0.0, %v744
        %v746 = vpop.f32.mrf.mxu0
        %v747 = vpop.f32.mrf.mxu0
        %v748 = vadd.f32 0.0, %v747
        %v749 = vpop.f32.mrf.mxu0
        %750 = vmatprep.mubr.bf16.mxu0 0
        %751 = vmatmul.mubr.bf16.gmra.mxu0 %v387
        %v752 = vpop.f32.mrf.mxu0
        %v753 = vadd.f32 0.0, %v752
        %v754 = vpop.f32.mrf.mxu0
        %v755 = vpop.f32.mrf.mxu0
        %v756 = vadd.f32 0.0, %v755
        %v757 = vpop.f32.mrf.mxu0
        %758 = vmatprep.mubr.bf16.mxu0 0
        %759 = vmatmul.mubr.bf16.gmra.mxu0 %v390
        %v760 = vpop.f32.mrf.mxu0
        %v761 = vadd.f32 0.0, %v760
        %v762 = vpop.f32.mrf.mxu0
        %v763 = vpop.f32.mrf.mxu0
        %v764 = vadd.f32 0.0, %v763
        %v765 = vpop.f32.mrf.mxu0
        %766 = vmatprep.mubr.bf16.mxu0 0
        %767 = vmatmul.mubr.bf16.gmra.mxu0 %v393
        %v768 = vpop.f32.mrf.mxu0
        %v769 = vadd.f32 0.0, %v768
        %v770 = vpop.f32.mrf.mxu0
        %v771 = vpop.f32.mrf.mxu0
        %v772 = vadd.f32 0.0, %v771
        %v773 = vpop.f32.mrf.mxu0
        %774 = vmatprep.mubr.bf16.mxu0 0
        %775 = vmatmul.mubr.bf16.gmra.mxu0 %v396
        %v776 = vpop.f32.mrf.mxu0
        %v777 = vadd.f32 0.0, %v776
        %v778 = vpop.f32.mrf.mxu0
        %v779 = vpop.f32.mrf.mxu0
        %v780 = vadd.f32 0.0, %v779
        %v781 = vpop.f32.mrf.mxu0
        %782 = vmatprep.mubr.bf16.mxu0 0
        %783 = vmatmul.mubr.bf16.gmra.mxu0 %v399
        %v784 = vpop.f32.mrf.mxu0
        %v785 = vadd.f32 0.0, %v784
        %v786 = vpop.f32.mrf.mxu0
        %v787 = vpop.f32.mrf.mxu0
        %v788 = vadd.f32 0.0, %v787
        %v789 = vpop.f32.mrf.mxu0
        %790 = vmatprep.mubr.bf16.mxu0 0
        %791 = vmatmul.mubr.bf16.gmra.mxu0 %v402
        %v792 = vpop.f32.mrf.mxu0
        %v793 = vadd.f32 0.0, %v792
        %v794 = vpop.f32.mrf.mxu0
        %v795 = vpop.f32.mrf.mxu0
        %v796 = vadd.f32 0.0, %v795
        %v797 = vpop.f32.mrf.mxu0
        %798 = vdwg.mxu0
        %v799 = vld [vmem:[%s241 + $0x18] sm:$0xf]
        %v800 = vld [vmem:[%s241 + $0x1c] sm:$0xf]
        %v803 = vunpack.c.l.b16 %v799
        %v804 = vunpack.c.l.b16 %v800
        %v805 = vpack.c.b16 %v804, %v803
        %v807 = vsel %vm294, %v805, 0
        %809 = vmatprep.subr.bf16.mxu0 0
        %810 = vmatpush1.bf16.msra.mxu0 0
        %811 = vmatprep.subr.bf16.mxu0 0
        %812 = vmatpush1.bf16.msra.mxu0 0
        %813 = vmatprep.subr.bf16.mxu0 0
        %814 = vmatpush1.bf16.msra.mxu0 0
        %815 = vmatprep.subr.bf16.mxu0 0
        %816 = vmatpush1.bf16.msra.mxu0 0
        %817 = vmatprep.subr.bf16.mxu0 0
        %818 = vmatpush1.bf16.msra.mxu0 0
        %819 = vmatprep.subr.bf16.mxu0 0
        %820 = vmatpush1.bf16.msra.mxu0 0
        %821 = vmatprep.subr.bf16.mxu0 0
        %822 = vmatpush1.bf16.msra.mxu0 0
        %823 = vmatprep.subr.bf16.mxu0 0
        %824 = vmatpush1.bf16.msra.mxu0 %v292
        %825 = vmatprep.subr.bf16.mxu0 0
        %826 = vmatpush2.bf16.msra.mxu0 0
        %827 = vmatprep.subr.bf16.mxu0 0
        %828 = vmatpush2.bf16.msra.mxu0 0
        %829 = vmatprep.subr.bf16.mxu0 0
        %830 = vmatpush2.bf16.msra.mxu0 0
        %831 = vmatprep.subr.bf16.mxu0 0
        %832 = vmatpush2.bf16.msra.mxu0 0
        %833 = vmatprep.subr.bf16.mxu0 0
        %834 = vmatpush2.bf16.msra.mxu0 0
        %835 = vmatprep.subr.bf16.mxu0 0
        %836 = vmatpush2.bf16.msra.mxu0 0
        %837 = vmatprep.subr.bf16.mxu0 0
        %838 = vmatpush2.bf16.msra.mxu0 0
        %839 = vmatprep.subr.bf16.mxu0 0
        %840 = vmatpush2.bf16.msra.mxu0 0
        %841 = vmatprep.mubr.bf16.mxu0 0
        %842 = vmatmul.mubr.bf16.gmra.mxu0 %v807
        %v843 = vpop.f32.mrf.mxu0
        %v844 = vadd.f32 0.0, %v843
        %v845 = vpop.f32.mrf.mxu0
        %v846 = vpop.f32.mrf.mxu0
        %v847 = vadd.f32 0.0, %v846
        %v848 = vpop.f32.mrf.mxu0
        %849 = vdwg.mxu0
        %v850 = vpack.c.bf16 %v847, %v844
        %851 = vmatprep.subr.bf16.mxu0 0
        %852 = vmatpush1.bf16.msra.mxu0 0
        %853 = vmatprep.subr.bf16.mxu0 0
        %854 = vmatpush1.bf16.msra.mxu0 0
        %855 = vmatprep.subr.bf16.mxu0 0
        %856 = vmatpush1.bf16.msra.mxu0 0
        %857 = vmatprep.subr.bf16.mxu0 0
        %858 = vmatpush1.bf16.msra.mxu0 0
        %859 = vmatprep.subr.bf16.mxu0 0
        %860 = vmatpush1.bf16.msra.mxu0 0
        %861 = vmatprep.subr.bf16.mxu0 0
        %862 = vmatpush1.bf16.msra.mxu0 0
        %863 = vmatprep.subr.bf16.mxu0 0
        %864 = vmatpush1.bf16.msra.mxu0 0
        %865 = vmatprep.subr.bf16.mxu0 0
        %866 = vmatpush1.bf16.msra.mxu0 %v850
        %867 = vmatprep.subr.bf16.mxu0 0
        %868 = vmatpush2.bf16.msra.mxu0 0
        %869 = vmatprep.subr.bf16.mxu0 0
        %870 = vmatpush2.bf16.msra.mxu0 0
        %871 = vmatprep.subr.bf16.mxu0 0
        %872 = vmatpush2.bf16.msra.mxu0 0
        %873 = vmatprep.subr.bf16.mxu0 0
        %874 = vmatpush2.bf16.msra.mxu0 0
        %875 = vmatprep.subr.bf16.mxu0 0
        %876 = vmatpush2.bf16.msra.mxu0 0
        %877 = vmatprep.subr.bf16.mxu0 0
        %878 = vmatpush2.bf16.msra.mxu0 0
        %879 = vmatprep.subr.bf16.mxu0 0
        %880 = vmatpush2.bf16.msra.mxu0 0
        %881 = vmatprep.subr.bf16.mxu0 0
        %882 = vmatpush2.bf16.msra.mxu0 0
        %883 = vmatprep.mubr.bf16.mxu0 0
        %884 = vmatmul.mubr.bf16.gmra.mxu0 %v381
        %v885 = vpop.f32.mrf.mxu0
        %v886 = vadd.f32 0.0, %v885
        %v887 = vpop.f32.mrf.mxu0
        %v888 = vpop.f32.mrf.mxu0
        %v889 = vadd.f32 0.0, %v888
        %v890 = vpop.f32.mrf.mxu0
        %891 = vmatprep.mubr.bf16.mxu0 0
        %892 = vmatmul.mubr.bf16.gmra.mxu0 %v384
        %v893 = vpop.f32.mrf.mxu0
        %v894 = vadd.f32 0.0, %v893
        %v895 = vpop.f32.mrf.mxu0
        %v896 = vpop.f32.mrf.mxu0
        %v897 = vadd.f32 0.0, %v896
        %v898 = vpop.f32.mrf.mxu0
        %899 = vmatprep.mubr.bf16.mxu0 0
        %900 = vmatmul.mubr.bf16.gmra.mxu0 %v387
        %v901 = vpop.f32.mrf.mxu0
        %v902 = vadd.f32 0.0, %v901
        %v903 = vpop.f32.mrf.mxu0
        %v904 = vpop.f32.mrf.mxu0
        %v905 = vadd.f32 0.0, %v904
        %v906 = vpop.f32.mrf.mxu0
        %907 = vmatprep.mubr.bf16.mxu0 0
        %908 = vmatmul.mubr.bf16.gmra.mxu0 %v390
        %v909 = vpop.f32.mrf.mxu0
        %v910 = vadd.f32 0.0, %v909
        %v911 = vpop.f32.mrf.mxu0
        %v912 = vpop.f32.mrf.mxu0
        %v913 = vadd.f32 0.0, %v912
        %v914 = vpop.f32.mrf.mxu0
        %915 = vmatprep.mubr.bf16.mxu0 0
        %916 = vmatmul.mubr.bf16.gmra.mxu0 %v393
        %v917 = vpop.f32.mrf.mxu0
        %v918 = vadd.f32 0.0, %v917
        %v919 = vpop.f32.mrf.mxu0
        %v920 = vpop.f32.mrf.mxu0
        %v921 = vadd.f32 0.0, %v920
        %v922 = vpop.f32.mrf.mxu0
        %923 = vmatprep.mubr.bf16.mxu0 0
        %924 = vmatmul.mubr.bf16.gmra.mxu0 %v396
        %v925 = vpop.f32.mrf.mxu0
        %v926 = vadd.f32 0.0, %v925
        %v927 = vpop.f32.mrf.mxu0
        %v928 = vpop.f32.mrf.mxu0
        %v929 = vadd.f32 0.0, %v928
        %v930 = vpop.f32.mrf.mxu0
        %931 = vmatprep.mubr.bf16.mxu0 0
        %932 = vmatmul.mubr.bf16.gmra.mxu0 %v399
        %v933 = vpop.f32.mrf.mxu0
        %v934 = vadd.f32 0.0, %v933
        %v935 = vpop.f32.mrf.mxu0
        %v936 = vpop.f32.mrf.mxu0
        %v937 = vadd.f32 0.0, %v936
        %v938 = vpop.f32.mrf.mxu0
        %939 = vmatprep.mubr.bf16.mxu0 0
        %940 = vmatmul.mubr.bf16.gmra.mxu0 %v402
        %v941 = vpop.f32.mrf.mxu0
        %v942 = vadd.f32 0.0, %v941
        %v943 = vpop.f32.mrf.mxu0
        %v944 = vpop.f32.mrf.mxu0
        %v945 = vadd.f32 0.0, %v944
        %v946 = vpop.f32.mrf.mxu0
        %947 = vdwg.mxu0
        %v948 = vld [vmem:[%s241 + $0x20] sm:$0xf]
        %v949 = vld [vmem:[%s241 + $0x24] sm:$0xf]
        %v952 = vunpack.c.l.b16 %v948
        %v953 = vunpack.c.l.b16 %v949
        %v954 = vpack.c.b16 %v953, %v952
        %v956 = vsel %vm294, %v954, 0
        %958 = vmatprep.subr.bf16.mxu0 0
        %959 = vmatpush1.bf16.msra.mxu0 0
        %960 = vmatprep.subr.bf16.mxu0 0
        %961 = vmatpush1.bf16.msra.mxu0 0
        %962 = vmatprep.subr.bf16.mxu0 0
        %963 = vmatpush1.bf16.msra.mxu0 0
        %964 = vmatprep.subr.bf16.mxu0 0
        %965 = vmatpush1.bf16.msra.mxu0 0
        %966 = vmatprep.subr.bf16.mxu0 0
        %967 = vmatpush1.bf16.msra.mxu0 0
        %968 = vmatprep.subr.bf16.mxu0 0
        %969 = vmatpush1.bf16.msra.mxu0 0
        %970 = vmatprep.subr.bf16.mxu0 0
        %971 = vmatpush1.bf16.msra.mxu0 0
        %972 = vmatprep.subr.bf16.mxu0 0
        %973 = vmatpush1.bf16.msra.mxu0 %v292
        %974 = vmatprep.subr.bf16.mxu0 0
        %975 = vmatpush2.bf16.msra.mxu0 0
        %976 = vmatprep.subr.bf16.mxu0 0
        %977 = vmatpush2.bf16.msra.mxu0 0
        %978 = vmatprep.subr.bf16.mxu0 0
        %979 = vmatpush2.bf16.msra.mxu0 0
        %980 = vmatprep.subr.bf16.mxu0 0
        %981 = vmatpush2.bf16.msra.mxu0 0
        %982 = vmatprep.subr.bf16.mxu0 0
        %983 = vmatpush2.bf16.msra.mxu0 0
        %984 = vmatprep.subr.bf16.mxu0 0
        %985 = vmatpush2.bf16.msra.mxu0 0
        %986 = vmatprep.subr.bf16.mxu0 0
        %987 = vmatpush2.bf16.msra.mxu0 0
        %988 = vmatprep.subr.bf16.mxu0 0
        %989 = vmatpush2.bf16.msra.mxu0 0
        %990 = vmatprep.mubr.bf16.mxu0 0
        %991 = vmatmul.mubr.bf16.gmra.mxu0 %v956
        %v992 = vpop.f32.mrf.mxu0
        %v993 = vadd.f32 0.0, %v992
        %v994 = vpop.f32.mrf.mxu0
        %v995 = vpop.f32.mrf.mxu0
        %v996 = vadd.f32 0.0, %v995
        %v997 = vpop.f32.mrf.mxu0
        %998 = vdwg.mxu0
        %v999 = vpack.c.bf16 %v996, %v993
        %1000 = vmatprep.subr.bf16.mxu0 0
        %1001 = vmatpush1.bf16.msra.mxu0 0
        %1002 = vmatprep.subr.bf16.mxu0 0
        %1003 = vmatpush1.bf16.msra.mxu0 0
        %1004 = vmatprep.subr.bf16.mxu0 0
        %1005 = vmatpush1.bf16.msra.mxu0 0
        %1006 = vmatprep.subr.bf16.mxu0 0
        %1007 = vmatpush1.bf16.msra.mxu0 0
        %1008 = vmatprep.subr.bf16.mxu0 0
        %1009 = vmatpush1.bf16.msra.mxu0 0
        %1010 = vmatprep.subr.bf16.mxu0 0
        %1011 = vmatpush1.bf16.msra.mxu0 0
        %1012 = vmatprep.subr.bf16.mxu0 0
        %1013 = vmatpush1.bf16.msra.mxu0 0
        %1014 = vmatprep.subr.bf16.mxu0 0
        %1015 = vmatpush1.bf16.msra.mxu0 %v999
        %1016 = vmatprep.subr.bf16.mxu0 0
        %1017 = vmatpush2.bf16.msra.mxu0 0
        %1018 = vmatprep.subr.bf16.mxu0 0
        %1019 = vmatpush2.bf16.msra.mxu0 0
        %1020 = vmatprep.subr.bf16.mxu0 0
        %1021 = vmatpush2.bf16.msra.mxu0 0
        %1022 = vmatprep.subr.bf16.mxu0 0
        %1023 = vmatpush2.bf16.msra.mxu0 0
        %1024 = vmatprep.subr.bf16.mxu0 0
        %1025 = vmatpush2.bf16.msra.mxu0 0
        %1026 = vmatprep.subr.bf16.mxu0 0
        %1027 = vmatpush2.bf16.msra.mxu0 0
        %1028 = vmatprep.subr.bf16.mxu0 0
        %1029 = vmatpush2.bf16.msra.mxu0 0
        %1030 = vmatprep.subr.bf16.mxu0 0
        %1031 = vmatpush2.bf16.msra.mxu0 0
        %1032 = vmatprep.mubr.bf16.mxu0 0
        %1033 = vmatmul.mubr.bf16.gmra.mxu0 %v381
        %v1034 = vpop.f32.mrf.mxu0
        %v1035 = vadd.f32 0.0, %v1034
        %v1036 = vpop.f32.mrf.mxu0
        %v1037 = vpop.f32.mrf.mxu0
        %v1038 = vadd.f32 0.0, %v1037
        %v1039 = vpop.f32.mrf.mxu0
        %1040 = vmatprep.mubr.bf16.mxu0 0
        %1041 = vmatmul.mubr.bf16.gmra.mxu0 %v384
        %v1042 = vpop.f32.mrf.mxu0
        %v1043 = vadd.f32 0.0, %v1042
        %v1044 = vpop.f32.mrf.mxu0
        %v1045 = vpop.f32.mrf.mxu0
        %v1046 = vadd.f32 0.0, %v1045
        %v1047 = vpop.f32.mrf.mxu0
        %1048 = vmatprep.mubr.bf16.mxu0 0
        %1049 = vmatmul.mubr.bf16.gmra.mxu0 %v387
        %v1050 = vpop.f32.mrf.mxu0
        %v1051 = vadd.f32 0.0, %v1050
        %v1052 = vpop.f32.mrf.mxu0
        %v1053 = vpop.f32.mrf.mxu0
        %v1054 = vadd.f32 0.0, %v1053
        %v1055 = vpop.f32.mrf.mxu0
        %1056 = vmatprep.mubr.bf16.mxu0 0
        %1057 = vmatmul.mubr.bf16.gmra.mxu0 %v390
        %v1058 = vpop.f32.mrf.mxu0
        %v1059 = vadd.f32 0.0, %v1058
        %v1060 = vpop.f32.mrf.mxu0
        %v1061 = vpop.f32.mrf.mxu0
        %v1062 = vadd.f32 0.0, %v1061
        %v1063 = vpop.f32.mrf.mxu0
        %1064 = vmatprep.mubr.bf16.mxu0 0
        %1065 = vmatmul.mubr.bf16.gmra.mxu0 %v393
        %v1066 = vpop.f32.mrf.mxu0
        %v1067 = vadd.f32 0.0, %v1066
        %v1068 = vpop.f32.mrf.mxu0
        %v1069 = vpop.f32.mrf.mxu0
        %v1070 = vadd.f32 0.0, %v1069
        %v1071 = vpop.f32.mrf.mxu0
        %1072 = vmatprep.mubr.bf16.mxu0 0
        %1073 = vmatmul.mubr.bf16.gmra.mxu0 %v396
        %v1074 = vpop.f32.mrf.mxu0
        %v1075 = vadd.f32 0.0, %v1074
        %v1076 = vpop.f32.mrf.mxu0
        %v1077 = vpop.f32.mrf.mxu0
        %v1078 = vadd.f32 0.0, %v1077
        %v1079 = vpop.f32.mrf.mxu0
        %1080 = vmatprep.mubr.bf16.mxu0 0
        %1081 = vmatmul.mubr.bf16.gmra.mxu0 %v399
        %v1082 = vpop.f32.mrf.mxu0
        %v1083 = vadd.f32 0.0, %v1082
        %v1084 = vpop.f32.mrf.mxu0
        %v1085 = vpop.f32.mrf.mxu0
        %v1086 = vadd.f32 0.0, %v1085
        %v1087 = vpop.f32.mrf.mxu0
        %1088 = vmatprep.mubr.bf16.mxu0 0
        %1089 = vmatmul.mubr.bf16.gmra.mxu0 %v402
        %v1090 = vpop.f32.mrf.mxu0
        %v1091 = vadd.f32 0.0, %v1090
        %v1092 = vpop.f32.mrf.mxu0
        %v1093 = vpop.f32.mrf.mxu0
        %v1094 = vadd.f32 0.0, %v1093
        %v1095 = vpop.f32.mrf.mxu0
        %1096 = vdwg.mxu0
        %v1097 = vld [vmem:[%s241 + $0x28] sm:$0xf]
        %v1098 = vld [vmem:[%s241 + $0x2c] sm:$0xf]
        %v1101 = vunpack.c.l.b16 %v1097
        %v1102 = vunpack.c.l.b16 %v1098
        %v1103 = vpack.c.b16 %v1102, %v1101
        %v1105 = vsel %vm294, %v1103, 0
        %1107 = vmatprep.subr.bf16.mxu0 0
        %1108 = vmatpush1.bf16.msra.mxu0 0
        %1109 = vmatprep.subr.bf16.mxu0 0
        %1110 = vmatpush1.bf16.msra.mxu0 0
        %1111 = vmatprep.subr.bf16.mxu0 0
        %1112 = vmatpush1.bf16.msra.mxu0 0
        %1113 = vmatprep.subr.bf16.mxu0 0
        %1114 = vmatpush1.bf16.msra.mxu0 0
        %1115 = vmatprep.subr.bf16.mxu0 0
        %1116 = vmatpush1.bf16.msra.mxu0 0
        %1117 = vmatprep.subr.bf16.mxu0 0
        %1118 = vmatpush1.bf16.msra.mxu0 0
        %1119 = vmatprep.subr.bf16.mxu0 0
        %1120 = vmatpush1.bf16.msra.mxu0 0
        %1121 = vmatprep.subr.bf16.mxu0 0
        %1122 = vmatpush1.bf16.msra.mxu0 %v292
        %1123 = vmatprep.subr.bf16.mxu0 0
        %1124 = vmatpush2.bf16.msra.mxu0 0
        %1125 = vmatprep.subr.bf16.mxu0 0
        %1126 = vmatpush2.bf16.msra.mxu0 0
        %1127 = vmatprep.subr.bf16.mxu0 0
        %1128 = vmatpush2.bf16.msra.mxu0 0
        %1129 = vmatprep.subr.bf16.mxu0 0
        %1130 = vmatpush2.bf16.msra.mxu0 0
        %1131 = vmatprep.subr.bf16.mxu0 0
        %1132 = vmatpush2.bf16.msra.mxu0 0
        %1133 = vmatprep.subr.bf16.mxu0 0
        %1134 = vmatpush2.bf16.msra.mxu0 0
        %1135 = vmatprep.subr.bf16.mxu0 0
        %1136 = vmatpush2.bf16.msra.mxu0 0
        %1137 = vmatprep.subr.bf16.mxu0 0
        %1138 = vmatpush2.bf16.msra.mxu0 0
        %1139 = vmatprep.mubr.bf16.mxu0 0
        %1140 = vmatmul.mubr.bf16.gmra.mxu0 %v1105
        %v1141 = vpop.f32.mrf.mxu0
        %v1142 = vadd.f32 0.0, %v1141
        %v1143 = vpop.f32.mrf.mxu0
        %v1144 = vpop.f32.mrf.mxu0
        %v1145 = vadd.f32 0.0, %v1144
        %v1146 = vpop.f32.mrf.mxu0
        %1147 = vdwg.mxu0
        %v1148 = vpack.c.bf16 %v1145, %v1142
        %1149 = vmatprep.subr.bf16.mxu0 0
        %1150 = vmatpush1.bf16.msra.mxu0 0
        %1151 = vmatprep.subr.bf16.mxu0 0
        %1152 = vmatpush1.bf16.msra.mxu0 0
        %1153 = vmatprep.subr.bf16.mxu0 0
        %1154 = vmatpush1.bf16.msra.mxu0 0
        %1155 = vmatprep.subr.bf16.mxu0 0
        %1156 = vmatpush1.bf16.msra.mxu0 0
        %1157 = vmatprep.subr.bf16.mxu0 0
        %1158 = vmatpush1.bf16.msra.mxu0 0
        %1159 = vmatprep.subr.bf16.mxu0 0
        %1160 = vmatpush1.bf16.msra.mxu0 0
        %1161 = vmatprep.subr.bf16.mxu0 0
        %1162 = vmatpush1.bf16.msra.mxu0 0
        %1163 = vmatprep.subr.bf16.mxu0 0
        %1164 = vmatpush1.bf16.msra.mxu0 %v1148
        %1165 = vmatprep.subr.bf16.mxu0 0
        %1166 = vmatpush2.bf16.msra.mxu0 0
        %1167 = vmatprep.subr.bf16.mxu0 0
        %1168 = vmatpush2.bf16.msra.mxu0 0
        %1169 = vmatprep.subr.bf16.mxu0 0
        %1170 = vmatpush2.bf16.msra.mxu0 0
        %1171 = vmatprep.subr.bf16.mxu0 0
        %1172 = vmatpush2.bf16.msra.mxu0 0
        %1173 = vmatprep.subr.bf16.mxu0 0
        %1174 = vmatpush2.bf16.msra.mxu0 0
        %1175 = vmatprep.subr.bf16.mxu0 0
        %1176 = vmatpush2.bf16.msra.mxu0 0
        %1177 = vmatprep.subr.bf16.mxu0 0
        %1178 = vmatpush2.bf16.msra.mxu0 0
        %1179 = vmatprep.subr.bf16.mxu0 0
        %1180 = vmatpush2.bf16.msra.mxu0 0
        %1181 = vmatprep.mubr.bf16.mxu0 0
        %1182 = vmatmul.mubr.bf16.gmra.mxu0 %v381
        %v1183 = vpop.f32.mrf.mxu0
        %v1184 = vadd.f32 0.0, %v1183
        %v1185 = vpop.f32.mrf.mxu0
        %v1186 = vpop.f32.mrf.mxu0
        %v1187 = vadd.f32 0.0, %v1186
        %v1188 = vpop.f32.mrf.mxu0
        %1189 = vmatprep.mubr.bf16.mxu0 0
        %1190 = vmatmul.mubr.bf16.gmra.mxu0 %v384
        %v1191 = vpop.f32.mrf.mxu0
        %v1192 = vadd.f32 0.0, %v1191
        %v1193 = vpop.f32.mrf.mxu0
        %v1194 = vpop.f32.mrf.mxu0
        %v1195 = vadd.f32 0.0, %v1194
        %v1196 = vpop.f32.mrf.mxu0
        %1197 = vmatprep.mubr.bf16.mxu0 0
        %1198 = vmatmul.mubr.bf16.gmra.mxu0 %v387
        %v1199 = vpop.f32.mrf.mxu0
        %v1200 = vadd.f32 0.0, %v1199
        %v1201 = vpop.f32.mrf.mxu0
        %v1202 = vpop.f32.mrf.mxu0
        %v1203 = vadd.f32 0.0, %v1202
        %v1204 = vpop.f32.mrf.mxu0
        %1205 = vmatprep.mubr.bf16.mxu0 0
        %1206 = vmatmul.mubr.bf16.gmra.mxu0 %v390
        %v1207 = vpop.f32.mrf.mxu0
        %v1208 = vadd.f32 0.0, %v1207
        %v1209 = vpop.f32.mrf.mxu0
        %v1210 = vpop.f32.mrf.mxu0
        %v1211 = vadd.f32 0.0, %v1210
        %v1212 = vpop.f32.mrf.mxu0
        %1213 = vmatprep.mubr.bf16.mxu0 0
        %1214 = vmatmul.mubr.bf16.gmra.mxu0 %v393
        %v1215 = vpop.f32.mrf.mxu0
        %v1216 = vadd.f32 0.0, %v1215
        %v1217 = vpop.f32.mrf.mxu0
        %v1218 = vpop.f32.mrf.mxu0
        %v1219 = vadd.f32 0.0, %v1218
        %v1220 = vpop.f32.mrf.mxu0
        %1221 = vmatprep.mubr.bf16.mxu0 0
        %1222 = vmatmul.mubr.bf16.gmra.mxu0 %v396
        %v1223 = vpop.f32.mrf.mxu0
        %v1224 = vadd.f32 0.0, %v1223
        %v1225 = vpop.f32.mrf.mxu0
        %v1226 = vpop.f32.mrf.mxu0
        %v1227 = vadd.f32 0.0, %v1226
        %v1228 = vpop.f32.mrf.mxu0
        %1229 = vmatprep.mubr.bf16.mxu0 0
        %1230 = vmatmul.mubr.bf16.gmra.mxu0 %v399
        %v1231 = vpop.f32.mrf.mxu0
        %v1232 = vadd.f32 0.0, %v1231
        %v1233 = vpop.f32.mrf.mxu0
        %v1234 = vpop.f32.mrf.mxu0
        %v1235 = vadd.f32 0.0, %v1234
        %v1236 = vpop.f32.mrf.mxu0
        %1237 = vmatprep.mubr.bf16.mxu0 0
        %1238 = vmatmul.mubr.bf16.gmra.mxu0 %v402
        %v1239 = vpop.f32.mrf.mxu0
        %v1240 = vadd.f32 0.0, %v1239
        %v1241 = vpop.f32.mrf.mxu0
        %v1242 = vpop.f32.mrf.mxu0
        %v1243 = vadd.f32 0.0, %v1242
        %v1244 = vpop.f32.mrf.mxu0
        %1245 = vdwg.mxu0
        %v1246 = vld [vmem:[%s241 + $0x30] sm:$0xf]
        %v1247 = vld [vmem:[%s241 + $0x34] sm:$0xf]
        %v1250 = vunpack.c.l.b16 %v1246
        %v1251 = vunpack.c.l.b16 %v1247
        %v1252 = vpack.c.b16 %v1251, %v1250
        %v1254 = vsel %vm294, %v1252, 0
        %1256 = vmatprep.subr.bf16.mxu0 0
        %1257 = vmatpush1.bf16.msra.mxu0 0
        %1258 = vmatprep.subr.bf16.mxu0 0
        %1259 = vmatpush1.bf16.msra.mxu0 0
        %1260 = vmatprep.subr.bf16.mxu0 0
        %1261 = vmatpush1.bf16.msra.mxu0 0
        %1262 = vmatprep.subr.bf16.mxu0 0
        %1263 = vmatpush1.bf16.msra.mxu0 0
        %1264 = vmatprep.subr.bf16.mxu0 0
        %1265 = vmatpush1.bf16.msra.mxu0 0
        %1266 = vmatprep.subr.bf16.mxu0 0
        %1267 = vmatpush1.bf16.msra.mxu0 0
        %1268 = vmatprep.subr.bf16.mxu0 0
        %1269 = vmatpush1.bf16.msra.mxu0 0
        %1270 = vmatprep.subr.bf16.mxu0 0
        %1271 = vmatpush1.bf16.msra.mxu0 %v292
        %1272 = vmatprep.subr.bf16.mxu0 0
        %1273 = vmatpush2.bf16.msra.mxu0 0
        %1274 = vmatprep.subr.bf16.mxu0 0
        %1275 = vmatpush2.bf16.msra.mxu0 0
        %1276 = vmatprep.subr.bf16.mxu0 0
        %1277 = vmatpush2.bf16.msra.mxu0 0
        %1278 = vmatprep.subr.bf16.mxu0 0
        %1279 = vmatpush2.bf16.msra.mxu0 0
        %1280 = vmatprep.subr.bf16.mxu0 0
        %1281 = vmatpush2.bf16.msra.mxu0 0
        %1282 = vmatprep.subr.bf16.mxu0 0
        %1283 = vmatpush2.bf16.msra.mxu0 0
        %1284 = vmatprep.subr.bf16.mxu0 0
        %1285 = vmatpush2.bf16.msra.mxu0 0
        %1286 = vmatprep.subr.bf16.mxu0 0
        %1287 = vmatpush2.bf16.msra.mxu0 0
        %1288 = vmatprep.mubr.bf16.mxu0 0
        %1289 = vmatmul.mubr.bf16.gmra.mxu0 %v1254
        %v1290 = vpop.f32.mrf.mxu0
        %v1291 = vadd.f32 0.0, %v1290
        %v1292 = vpop.f32.mrf.mxu0
        %v1293 = vpop.f32.mrf.mxu0
        %v1294 = vadd.f32 0.0, %v1293
        %v1295 = vpop.f32.mrf.mxu0
        %1296 = vdwg.mxu0
        %v1297 = vpack.c.bf16 %v1294, %v1291
        %1298 = vmatprep.subr.bf16.mxu0 0
        %1299 = vmatpush1.bf16.msra.mxu0 0
        %1300 = vmatprep.subr.bf16.mxu0 0
        %1301 = vmatpush1.bf16.msra.mxu0 0
        %1302 = vmatprep.subr.bf16.mxu0 0
        %1303 = vmatpush1.bf16.msra.mxu0 0
        %1304 = vmatprep.subr.bf16.mxu0 0
        %1305 = vmatpush1.bf16.msra.mxu0 0
        %1306 = vmatprep.subr.bf16.mxu0 0
        %1307 = vmatpush1.bf16.msra.mxu0 0
        %1308 = vmatprep.subr.bf16.mxu0 0
        %1309 = vmatpush1.bf16.msra.mxu0 0
        %1310 = vmatprep.subr.bf16.mxu0 0
        %1311 = vmatpush1.bf16.msra.mxu0 0
        %1312 = vmatprep.subr.bf16.mxu0 0
        %1313 = vmatpush1.bf16.msra.mxu0 %v1297
        %1314 = vmatprep.subr.bf16.mxu0 0
        %1315 = vmatpush2.bf16.msra.mxu0 0
        %1316 = vmatprep.subr.bf16.mxu0 0
        %1317 = vmatpush2.bf16.msra.mxu0 0
        %1318 = vmatprep.subr.bf16.mxu0 0
        %1319 = vmatpush2.bf16.msra.mxu0 0
        %1320 = vmatprep.subr.bf16.mxu0 0
        %1321 = vmatpush2.bf16.msra.mxu0 0
        %1322 = vmatprep.subr.bf16.mxu0 0
        %1323 = vmatpush2.bf16.msra.mxu0 0
        %1324 = vmatprep.subr.bf16.mxu0 0
        %1325 = vmatpush2.bf16.msra.mxu0 0
        %1326 = vmatprep.subr.bf16.mxu0 0
        %1327 = vmatpush2.bf16.msra.mxu0 0
        %1328 = vmatprep.subr.bf16.mxu0 0
        %1329 = vmatpush2.bf16.msra.mxu0 0
        %1330 = vmatprep.mubr.bf16.mxu0 0
        %1331 = vmatmul.mubr.bf16.gmra.mxu0 %v381
        %v1332 = vpop.f32.mrf.mxu0
        %v1333 = vadd.f32 0.0, %v1332
        %v1334 = vpop.f32.mrf.mxu0
        %v1335 = vpop.f32.mrf.mxu0
        %v1336 = vadd.f32 0.0, %v1335
        %v1337 = vpop.f32.mrf.mxu0
        %1338 = vmatprep.mubr.bf16.mxu0 0
        %1339 = vmatmul.mubr.bf16.gmra.mxu0 %v384
        %v1340 = vpop.f32.mrf.mxu0
        %v1341 = vadd.f32 0.0, %v1340
        %v1342 = vpop.f32.mrf.mxu0
        %v1343 = vpop.f32.mrf.mxu0
        %v1344 = vadd.f32 0.0, %v1343
        %v1345 = vpop.f32.mrf.mxu0
        %1346 = vmatprep.mubr.bf16.mxu0 0
        %1347 = vmatmul.mubr.bf16.gmra.mxu0 %v387
        %v1348 = vpop.f32.mrf.mxu0
        %v1349 = vadd.f32 0.0, %v1348
        %v1350 = vpop.f32.mrf.mxu0
        %v1351 = vpop.f32.mrf.mxu0
        %v1352 = vadd.f32 0.0, %v1351
        %v1353 = vpop.f32.mrf.mxu0
        %1354 = vmatprep.mubr.bf16.mxu0 0
        %1355 = vmatmul.mubr.bf16.gmra.mxu0 %v390
        %v1356 = vpop.f32.mrf.mxu0
        %v1357 = vadd.f32 0.0, %v1356
        %v1358 = vpop.f32.mrf.mxu0
        %v1359 = vpop.f32.mrf.mxu0
        %v1360 = vadd.f32 0.0, %v1359
        %v1361 = vpop.f32.mrf.mxu0
        %1362 = vmatprep.mubr.bf16.mxu0 0
        %1363 = vmatmul.mubr.bf16.gmra.mxu0 %v393
        %v1364 = vpop.f32.mrf.mxu0
        %v1365 = vadd.f32 0.0, %v1364
        %v1366 = vpop.f32.mrf.mxu0
        %v1367 = vpop.f32.mrf.mxu0
        %v1368 = vadd.f32 0.0, %v1367
        %v1369 = vpop.f32.mrf.mxu0
        %1370 = vmatprep.mubr.bf16.mxu0 0
        %1371 = vmatmul.mubr.bf16.gmra.mxu0 %v396
        %v1372 = vpop.f32.mrf.mxu0
        %v1373 = vadd.f32 0.0, %v1372
        %v1374 = vpop.f32.mrf.mxu0
        %v1375 = vpop.f32.mrf.mxu0
        %v1376 = vadd.f32 0.0, %v1375
        %v1377 = vpop.f32.mrf.mxu0
        %1378 = vmatprep.mubr.bf16.mxu0 0
        %1379 = vmatmul.mubr.bf16.gmra.mxu0 %v399
        %v1380 = vpop.f32.mrf.mxu0
        %v1381 = vadd.f32 0.0, %v1380
        %v1382 = vpop.f32.mrf.mxu0
        %v1383 = vpop.f32.mrf.mxu0
        %v1384 = vadd.f32 0.0, %v1383
        %v1385 = vpop.f32.mrf.mxu0
        %1386 = vmatprep.mubr.bf16.mxu0 0
        %1387 = vmatmul.mubr.bf16.gmra.mxu0 %v402
        %v1388 = vpop.f32.mrf.mxu0
        %v1389 = vadd.f32 0.0, %v1388
        %v1390 = vpop.f32.mrf.mxu0
        %v1391 = vpop.f32.mrf.mxu0
        %v1392 = vadd.f32 0.0, %v1391
        %v1393 = vpop.f32.mrf.mxu0
        %1394 = vdwg.mxu0
        %v1395 = vld [vmem:[%s241 + $0x38] sm:$0xf]
        %v1396 = vld [vmem:[%s241 + $0x3c] sm:$0xf]
        %v1399 = vunpack.c.l.b16 %v1395
        %v1400 = vunpack.c.l.b16 %v1396
        %v1401 = vpack.c.b16 %v1400, %v1399
        %v1403 = vsel %vm294, %v1401, 0
        %1405 = vmatprep.subr.bf16.mxu0 0
        %1406 = vmatpush1.bf16.msra.mxu0 0
        %1407 = vmatprep.subr.bf16.mxu0 0
        %1408 = vmatpush1.bf16.msra.mxu0 0
        %1409 = vmatprep.subr.bf16.mxu0 0
        %1410 = vmatpush1.bf16.msra.mxu0 0
        %1411 = vmatprep.subr.bf16.mxu0 0
        %1412 = vmatpush1.bf16.msra.mxu0 0
        %1413 = vmatprep.subr.bf16.mxu0 0
        %1414 = vmatpush1.bf16.msra.mxu0 0
        %1415 = vmatprep.subr.bf16.mxu0 0
        %1416 = vmatpush1.bf16.msra.mxu0 0
        %1417 = vmatprep.subr.bf16.mxu0 0
        %1418 = vmatpush1.bf16.msra.mxu0 0
        %1419 = vmatprep.subr.bf16.mxu0 0
        %1420 = vmatpush1.bf16.msra.mxu0 %v292
        %1421 = vmatprep.subr.bf16.mxu0 0
        %1422 = vmatpush2.bf16.msra.mxu0 0
        %1423 = vmatprep.subr.bf16.mxu0 0
        %1424 = vmatpush2.bf16.msra.mxu0 0
        %1425 = vmatprep.subr.bf16.mxu0 0
        %1426 = vmatpush2.bf16.msra.mxu0 0
        %1427 = vmatprep.subr.bf16.mxu0 0
        %1428 = vmatpush2.bf16.msra.mxu0 0
        %1429 = vmatprep.subr.bf16.mxu0 0
        %1430 = vmatpush2.bf16.msra.mxu0 0
        %1431 = vmatprep.subr.bf16.mxu0 0
        %1432 = vmatpush2.bf16.msra.mxu0 0
        %1433 = vmatprep.subr.bf16.mxu0 0
        %1434 = vmatpush2.bf16.msra.mxu0 0
        %1435 = vmatprep.subr.bf16.mxu0 0
        %1436 = vmatpush2.bf16.msra.mxu0 0
        %1437 = vmatprep.mubr.bf16.mxu0 0
        %1438 = vmatmul.mubr.bf16.gmra.mxu0 %v1403
        %v1439 = vpop.f32.mrf.mxu0
        %v1440 = vadd.f32 0.0, %v1439
        %v1441 = vpop.f32.mrf.mxu0
        %v1442 = vpop.f32.mrf.mxu0
        %v1443 = vadd.f32 0.0, %v1442
        %v1444 = vpop.f32.mrf.mxu0
        %1445 = vdwg.mxu0
        %v1446 = vpack.c.bf16 %v1443, %v1440
        %1447 = vmatprep.subr.bf16.mxu0 0
        %1448 = vmatpush1.bf16.msra.mxu0 0
        %1449 = vmatprep.subr.bf16.mxu0 0
        %1450 = vmatpush1.bf16.msra.mxu0 0
        %1451 = vmatprep.subr.bf16.mxu0 0
        %1452 = vmatpush1.bf16.msra.mxu0 0
        %1453 = vmatprep.subr.bf16.mxu0 0
        %1454 = vmatpush1.bf16.msra.mxu0 0
        %1455 = vmatprep.subr.bf16.mxu0 0
        %1456 = vmatpush1.bf16.msra.mxu0 0
        %1457 = vmatprep.subr.bf16.mxu0 0
        %1458 = vmatpush1.bf16.msra.mxu0 0
        %1459 = vmatprep.subr.bf16.mxu0 0
        %1460 = vmatpush1.bf16.msra.mxu0 0
        %1461 = vmatprep.subr.bf16.mxu0 0
        %1462 = vmatpush1.bf16.msra.mxu0 %v1446
        %1463 = vmatprep.subr.bf16.mxu0 0
        %1464 = vmatpush2.bf16.msra.mxu0 0
        %1465 = vmatprep.subr.bf16.mxu0 0
        %1466 = vmatpush2.bf16.msra.mxu0 0
        %1467 = vmatprep.subr.bf16.mxu0 0
        %1468 = vmatpush2.bf16.msra.mxu0 0
        %1469 = vmatprep.subr.bf16.mxu0 0
        %1470 = vmatpush2.bf16.msra.mxu0 0
        %1471 = vmatprep.subr.bf16.mxu0 0
        %1472 = vmatpush2.bf16.msra.mxu0 0
        %1473 = vmatprep.subr.bf16.mxu0 0
        %1474 = vmatpush2.bf16.msra.mxu0 0
        %1475 = vmatprep.subr.bf16.mxu0 0
        %1476 = vmatpush2.bf16.msra.mxu0 0
        %1477 = vmatprep.subr.bf16.mxu0 0
        %1478 = vmatpush2.bf16.msra.mxu0 0
        %1479 = vmatprep.mubr.bf16.mxu0 0
        %1480 = vmatmul.mubr.bf16.gmra.mxu0 %v381
        %v1481 = vpop.f32.mrf.mxu0
        %v1482 = vadd.f32 0.0, %v1481
        %v1483 = vpop.f32.mrf.mxu0
        %v1484 = vpop.f32.mrf.mxu0
        %v1485 = vadd.f32 0.0, %v1484
        %v1486 = vpop.f32.mrf.mxu0
        %1487 = vmatprep.mubr.bf16.mxu0 0
        %1488 = vmatmul.mubr.bf16.gmra.mxu0 %v384
        %v1489 = vpop.f32.mrf.mxu0
        %v1490 = vadd.f32 0.0, %v1489
        %v1491 = vpop.f32.mrf.mxu0
        %v1492 = vpop.f32.mrf.mxu0
        %v1493 = vadd.f32 0.0, %v1492
        %v1494 = vpop.f32.mrf.mxu0
        %1495 = vmatprep.mubr.bf16.mxu0 0
        %1496 = vmatmul.mubr.bf16.gmra.mxu0 %v387
        %v1497 = vpop.f32.mrf.mxu0
        %v1498 = vadd.f32 0.0, %v1497
        %v1499 = vpop.f32.mrf.mxu0
        %v1500 = vpop.f32.mrf.mxu0
        %v1501 = vadd.f32 0.0, %v1500
        %v1502 = vpop.f32.mrf.mxu0
        %1503 = vmatprep.mubr.bf16.mxu0 0
        %1504 = vmatmul.mubr.bf16.gmra.mxu0 %v390
        %v1505 = vpop.f32.mrf.mxu0
        %v1506 = vadd.f32 0.0, %v1505
        %v1507 = vpop.f32.mrf.mxu0
        %v1508 = vpop.f32.mrf.mxu0
        %v1509 = vadd.f32 0.0, %v1508
        %v1510 = vpop.f32.mrf.mxu0
        %1511 = vmatprep.mubr.bf16.mxu0 0
        %1512 = vmatmul.mubr.bf16.gmra.mxu0 %v393
        %v1513 = vpop.f32.mrf.mxu0
        %v1514 = vadd.f32 0.0, %v1513
        %v1515 = vpop.f32.mrf.mxu0
        %v1516 = vpop.f32.mrf.mxu0
        %v1517 = vadd.f32 0.0, %v1516
        %v1518 = vpop.f32.mrf.mxu0
        %1519 = vmatprep.mubr.bf16.mxu0 0
        %1520 = vmatmul.mubr.bf16.gmra.mxu0 %v396
        %v1521 = vpop.f32.mrf.mxu0
        %v1522 = vadd.f32 0.0, %v1521
        %v1523 = vpop.f32.mrf.mxu0
        %v1524 = vpop.f32.mrf.mxu0
        %v1525 = vadd.f32 0.0, %v1524
        %v1526 = vpop.f32.mrf.mxu0
        %1527 = vmatprep.mubr.bf16.mxu0 0
        %1528 = vmatmul.mubr.bf16.gmra.mxu0 %v399
        %v1529 = vpop.f32.mrf.mxu0
        %v1530 = vadd.f32 0.0, %v1529
        %v1531 = vpop.f32.mrf.mxu0
        %v1532 = vpop.f32.mrf.mxu0
        %v1533 = vadd.f32 0.0, %v1532
        %v1534 = vpop.f32.mrf.mxu0
        %1535 = vmatprep.mubr.bf16.mxu0 0
        %1536 = vmatmul.mubr.bf16.gmra.mxu0 %v402
        %v1537 = vpop.f32.mrf.mxu0
        %v1538 = vadd.f32 0.0, %v1537
        %v1539 = vpop.f32.mrf.mxu0
        %v1540 = vpop.f32.mrf.mxu0
        %v1541 = vadd.f32 0.0, %v1540
        %v1542 = vpop.f32.mrf.mxu0
        %1543 = vdwg.mxu0
        %1544 = vst [vmem:[%s259] sm:$0xff] %v439
        %1545 = vst [vmem:[%s259 + $0x8] sm:$0xff] %v588
        %1546 = vst [vmem:[%s259 + $0x10] sm:$0xff] %v737
        %1547 = vst [vmem:[%s259 + $0x18] sm:$0xff] %v886
        %1548 = vst [vmem:[%s259 + $0x20] sm:$0xff] %v1035
        %1549 = vst [vmem:[%s259 + $0x28] sm:$0xff] %v1184
        %1550 = vst [vmem:[%s259 + $0x30] sm:$0xff] %v1333
        %1551 = vst [vmem:[%s259 + $0x38] sm:$0xff] %v1482
        %1552 = vst [vmem:[%s259 + $0x40] sm:$0xff] %v442
        %1553 = vst [vmem:[%s259 + $0x48] sm:$0xff] %v591
        %1554 = vst [vmem:[%s259 + $0x50] sm:$0xff] %v740
        %1555 = vst [vmem:[%s259 + $0x58] sm:$0xff] %v889
        %1556 = vst [vmem:[%s259 + $0x60] sm:$0xff] %v1038
        %1557 = vst [vmem:[%s259 + $0x68] sm:$0xff] %v1187
        %1558 = vst [vmem:[%s259 + $0x70] sm:$0xff] %v1336
        %1559 = vst [vmem:[%s259 + $0x78] sm:$0xff] %v1485
        %1560 = vst [vmem:[%s259 + $0x80] sm:$0xff] %v447
        %1561 = vst [vmem:[%s259 + $0x88] sm:$0xff] %v596
        %1562 = vst [vmem:[%s259 + $0x90] sm:$0xff] %v745
        %1563 = vst [vmem:[%s259 + $0x98] sm:$0xff] %v894
        %1564 = vst [vmem:[%s259 + $0xa0] sm:$0xff] %v1043
        %1565 = vst [vmem:[%s259 + $0xa8] sm:$0xff] %v1192
        %1566 = vst [vmem:[%s259 + $0xb0] sm:$0xff] %v1341
        %1567 = vst [vmem:[%s259 + $0xb8] sm:$0xff] %v1490
        %1568 = vst [vmem:[%s259 + $0xc0] sm:$0xff] %v450
        %1569 = vst [vmem:[%s259 + $0xc8] sm:$0xff] %v599
        %1570 = vst [vmem:[%s259 + $0xd0] sm:$0xff] %v748
        %1571 = vst [vmem:[%s259 + $0xd8] sm:$0xff] %v897
        %1572 = vst [vmem:[%s259 + $0xe0] sm:$0xff] %v1046
        %1573 = vst [vmem:[%s259 + $0xe8] sm:$0xff] %v1195
        %1574 = vst [vmem:[%s259 + $0xf0] sm:$0xff] %v1344
        %1575 = vst [vmem:[%s259 + $0xf8] sm:$0xff] %v1493
        %1576 = vst [vmem:[%s259 + $0x100] sm:$0xff] %v455
        %1577 = vst [vmem:[%s259 + $0x108] sm:$0xff] %v604
        %1578 = vst [vmem:[%s259 + $0x110] sm:$0xff] %v753
        %1579 = vst [vmem:[%s259 + $0x118] sm:$0xff] %v902
        %1580 = vst [vmem:[%s259 + $0x120] sm:$0xff] %v1051
        %1581 = vst [vmem:[%s259 + $0x128] sm:$0xff] %v1200
        %1582 = vst [vmem:[%s259 + $0x130] sm:$0xff] %v1349
        %1583 = vst [vmem:[%s259 + $0x138] sm:$0xff] %v1498
        %1584 = vst [vmem:[%s259 + $0x140] sm:$0xff] %v458
        %1585 = vst [vmem:[%s259 + $0x148] sm:$0xff] %v607
        %1586 = vst [vmem:[%s259 + $0x150] sm:$0xff] %v756
        %1587 = vst [vmem:[%s259 + $0x158] sm:$0xff] %v905
        %1588 = vst [vmem:[%s259 + $0x160] sm:$0xff] %v1054
        %1589 = vst [vmem:[%s259 + $0x168] sm:$0xff] %v1203
        %1590 = vst [vmem:[%s259 + $0x170] sm:$0xff] %v1352
        %1591 = vst [vmem:[%s259 + $0x178] sm:$0xff] %v1501
        %1592 = vst [vmem:[%s259 + $0x180] sm:$0xff] %v463
        %1593 = vst [vmem:[%s259 + $0x188] sm:$0xff] %v612
        %1594 = vst [vmem:[%s259 + $0x190] sm:$0xff] %v761
        %1595 = vst [vmem:[%s259 + $0x198] sm:$0xff] %v910
        %1596 = vst [vmem:[%s259 + $0x1a0] sm:$0xff] %v1059
        %1597 = vst [vmem:[%s259 + $0x1a8] sm:$0xff] %v1208
        %1598 = vst [vmem:[%s259 + $0x1b0] sm:$0xff] %v1357
        %1599 = vst [vmem:[%s259 + $0x1b8] sm:$0xff] %v1506
        %1600 = vst [vmem:[%s259 + $0x1c0] sm:$0xff] %v466
        %1601 = vst [vmem:[%s259 + $0x1c8] sm:$0xff] %v615
        %1602 = vst [vmem:[%s259 + $0x1d0] sm:$0xff] %v764
        %1603 = vst [vmem:[%s259 + $0x1d8] sm:$0xff] %v913
        %1604 = vst [vmem:[%s259 + $0x1e0] sm:$0xff] %v1062
        %1605 = vst [vmem:[%s259 + $0x1e8] sm:$0xff] %v1211
        %1606 = vst [vmem:[%s259 + $0x1f0] sm:$0xff] %v1360
        %1607 = vst [vmem:[%s259 + $0x1f8] sm:$0xff] %v1509
        %1608 = vst [vmem:[%s259 + $0x200] sm:$0xff] %v471
        %1609 = vst [vmem:[%s259 + $0x208] sm:$0xff] %v620
        %1610 = vst [vmem:[%s259 + $0x210] sm:$0xff] %v769
        %1611 = vst [vmem:[%s259 + $0x218] sm:$0xff] %v918
        %1612 = vst [vmem:[%s259 + $0x220] sm:$0xff] %v1067
        %1613 = vst [vmem:[%s259 + $0x228] sm:$0xff] %v1216
        %1614 = vst [vmem:[%s259 + $0x230] sm:$0xff] %v1365
        %1615 = vst [vmem:[%s259 + $0x238] sm:$0xff] %v1514
        %1616 = vst [vmem:[%s259 + $0x240] sm:$0xff] %v474
        %1617 = vst [vmem:[%s259 + $0x248] sm:$0xff] %v623
        %1618 = vst [vmem:[%s259 + $0x250] sm:$0xff] %v772
        %1619 = vst [vmem:[%s259 + $0x258] sm:$0xff] %v921
        %1620 = vst [vmem:[%s259 + $0x260] sm:$0xff] %v1070
        %1621 = vst [vmem:[%s259 + $0x268] sm:$0xff] %v1219
        %1622 = vst [vmem:[%s259 + $0x270] sm:$0xff] %v1368
        %1623 = vst [vmem:[%s259 + $0x278] sm:$0xff] %v1517
        %1624 = vst [vmem:[%s259 + $0x280] sm:$0xff] %v479
        %1625 = vst [vmem:[%s259 + $0x288] sm:$0xff] %v628
        %1626 = vst [vmem:[%s259 + $0x290] sm:$0xff] %v777
        %1627 = vst [vmem:[%s259 + $0x298] sm:$0xff] %v926
        %1628 = vst [vmem:[%s259 + $0x2a0] sm:$0xff] %v1075
        %1629 = vst [vmem:[%s259 + $0x2a8] sm:$0xff] %v1224
        %1630 = vst [vmem:[%s259 + $0x2b0] sm:$0xff] %v1373
        %1631 = vst [vmem:[%s259 + $0x2b8] sm:$0xff] %v1522
        %1632 = vst [vmem:[%s259 + $0x2c0] sm:$0xff] %v482
        %1633 = vst [vmem:[%s259 + $0x2c8] sm:$0xff] %v631
        %1634 = vst [vmem:[%s259 + $0x2d0] sm:$0xff] %v780
        %1635 = vst [vmem:[%s259 + $0x2d8] sm:$0xff] %v929
        %1636 = vst [vmem:[%s259 + $0x2e0] sm:$0xff] %v1078
        %1637 = vst [vmem:[%s259 + $0x2e8] sm:$0xff] %v1227
        %1638 = vst [vmem:[%s259 + $0x2f0] sm:$0xff] %v1376
        %1639 = vst [vmem:[%s259 + $0x2f8] sm:$0xff] %v1525
        %1640 = vst [vmem:[%s259 + $0x300] sm:$0xff] %v487
        %1641 = vst [vmem:[%s259 + $0x308] sm:$0xff] %v636
        %1642 = vst [vmem:[%s259 + $0x310] sm:$0xff] %v785
        %1643 = vst [vmem:[%s259 + $0x318] sm:$0xff] %v934
        %1644 = vst [vmem:[%s259 + $0x320] sm:$0xff] %v1083
        %1645 = vst [vmem:[%s259 + $0x328] sm:$0xff] %v1232
        %1646 = vst [vmem:[%s259 + $0x330] sm:$0xff] %v1381
        %1647 = vst [vmem:[%s259 + $0x338] sm:$0xff] %v1530
        %1648 = vst [vmem:[%s259 + $0x340] sm:$0xff] %v490
        %1649 = vst [vmem:[%s259 + $0x348] sm:$0xff] %v639
        %1650 = vst [vmem:[%s259 + $0x350] sm:$0xff] %v788
        %1651 = vst [vmem:[%s259 + $0x358] sm:$0xff] %v937
        %1652 = vst [vmem:[%s259 + $0x360] sm:$0xff] %v1086
        %1653 = vst [vmem:[%s259 + $0x368] sm:$0xff] %v1235
        %1654 = vst [vmem:[%s259 + $0x370] sm:$0xff] %v1384
        %1655 = vst [vmem:[%s259 + $0x378] sm:$0xff] %v1533
        %1656 = vst [vmem:[%s259 + $0x380] sm:$0xff] %v495
        %1657 = vst [vmem:[%s259 + $0x388] sm:$0xff] %v644
        %1658 = vst [vmem:[%s259 + $0x390] sm:$0xff] %v793
        %1659 = vst [vmem:[%s259 + $0x398] sm:$0xff] %v942
        %1660 = vst [vmem:[%s259 + $0x3a0] sm:$0xff] %v1091
        %1661 = vst [vmem:[%s259 + $0x3a8] sm:$0xff] %v1240
        %1662 = vst [vmem:[%s259 + $0x3b0] sm:$0xff] %v1389
        %1663 = vst [vmem:[%s259 + $0x3b8] sm:$0xff] %v1538
        %1664 = vst [vmem:[%s259 + $0x3c0] sm:$0xff] %v498
        %1665 = vst [vmem:[%s259 + $0x3c8] sm:$0xff] %v647
        %1666 = vst [vmem:[%s259 + $0x3d0] sm:$0xff] %v796
        %1667 = vst [vmem:[%s259 + $0x3d8] sm:$0xff] %v945
        %1668 = vst [vmem:[%s259 + $0x3e0] sm:$0xff] %v1094
        %1669 = vst [vmem:[%s259 + $0x3e8] sm:$0xff] %v1243
        %1670 = vst [vmem:[%s259 + $0x3f0] sm:$0xff] %v1392
        %1671 = vst [vmem:[%s259 + $0x3f8] sm:$0xff] %v1541
        %s1672 = smul.u32 16, %s22
        %s1673 = smul.u32 8, %s21
        %p1674 = scmp.lt.s32.totalorder %s1672, 127
        %s1675 = scalar_select %p1674, %s1672, 127
        %p1676 = scmp.lt.s32.totalorder %s1673, 7
        %s1677 = scalar_select %p1676, %s1673, 7
        %s1678 = smul.addr %s1675, 8
        %s1679 = sadd.s32 %s1677, %s1678
        %s1680 = smul.addr %s1679, 8
        %s1681 = scalar_lea.vmem %s3, %s1680
        // Predicated region
        $region37: #{_fused_cutouts.1} parent=31 // pred_check
          %p1682 = pneg %p127
        $region38: #{_fused_cutouts.1} parent=31 // pred_check_branch
          %1684 = sbr.rel (%p1682) target = $region40
        $region39: #{_fused_cutouts.1} parent=31 // pred_region
          %s1685 = smul.u32 16, %s22
          %s1686 = smul.u32 8, %s21
        $region40: #{_fused_cutouts.1} parent=31 // pred_fallthru
          _
      $region32: #{_fused_cutouts.1} parent=5 // pred_fallthru
        _
      %p1687 = scmp.le.s32.totalorder 2, %s12
      // Predicated region
      $region41: #{_fused_cutouts.1} parent=5 // pred_check
        %p1688 = pneg %p1687
      $region42: #{_fused_cutouts.1} parent=5 // pred_check_branch
        %1690 = sbr.rel (%p1688) target = $region44
      $region43: #{_fused_cutouts.1} parent=5 // pred_region
        %s1691 = ssub.s32 %s12, 2
        // Predicated region
        $region45: #{_fused_cutouts.1} parent=43 // pred_check
          %p1692 = pneg %p133
        $region46: #{_fused_cutouts.1} parent=43 // pred_check_branch
          %1694 = sbr.rel (%p1692) target = $region48
        $region47: #{_fused_cutouts.1} parent=43 // pred_region
          %s1695 = smul.u32 16, %s24
          %s1696 = smul.u32 8, %s23
          %p1697 = scmp.lt.s32.totalorder %s1695, 127
          %s1698 = scalar_select %p1697, %s1695, 127
          %p1699 = scmp.lt.s32.totalorder %s1696, 7
          %s1700 = scalar_select %p1699, %s1696, 7
          %s1701 = smul.addr %s1698, 8
          %s1702 = sadd.s32 %s1700, %s1701
          %s1703 = smul.addr %s1702, 8
          %s1704 = scalar_lea.vmem %s3, %s1703
        $region48: #{_fused_cutouts.1} parent=43 // pred_fallthru
          _
      $region44: #{_fused_cutouts.1} parent=5 // pred_fallthru
        _
    $region6: #{_fused_cutouts.1} parent=1 // loop_footer
      %s16 = sadd.s32 1, %s12
    $region7: #{_fused_cutouts.1} parent=1 // loop_footer_branch
      %11 = sbr.rel target = $region3
    $region8: #{_fused_cutouts.1} parent=1 // loop_exit
      _
    %1705 = vsyncpa [#allocation3], 1
    %s1706 = scalar_lea.sflag [#allocation3], 1
    %1707 = vsyncpa %s1706, 1

</llo_original>
